<compile_context>
chip_gen: v7x
topology: tpu7x:2x2x1
jax: 0.10.0
libtpu: 0.0.40
codegen_flags: <defaults>
</compile_context>

<pallas_src>
import functools

import jax
import jax.numpy as jnp
import numpy as np
from jax import lax
from jax.experimental import pallas as pl
from jax.experimental.pallas import tpu as pltpu


# ----------------------------------------------------------------------------
# small helper shared by kernel and reference
# ----------------------------------------------------------------------------
def _softplus(x):
    # numerically stable softplus (torch threshold=20 semantics), EUP friendly
    return jnp.where(x > 20.0, x, jnp.log(1.0 + jnp.exp(jnp.minimum(x, 20.0))))


# ----------------------------------------------------------------------------
# Fused Pallas kernel: implicit-net SDF MLP + volSDF sigma + opacity reduction.
# One grid step handles tr rays; samples are swept in chunks of s_chunk so the
# MXU RHS is (H, s_chunk*tr) wide.
# ----------------------------------------------------------------------------
def _fused_occlusion_kernel(scal_ref, w1b_ref, b2_ref, w3_ref, w2_ref,
                            t_ref, cam_ref, dir_ref, valid_ref, o_ref,
                            *, s_chunk, n_chunks, mxu_dtype, act_dtype):
    H = w2_ref.shape[0]
    tr = t_ref.shape[1]
    inv_beta = 1.0 / scal_ref[0]                 # volSDF 1/beta (SMEM scalar)
    b3 = scal_ref[1]                             # sdf-head bias  (SMEM scalar)

    # --- loop-invariant per-ray-tile precompute (hoisted out of the sample loop) ---
    w1b = w1b_ref[...]                                           # (H,4) = [W1^T | b1]
    # K=3 contraction done as VPU FMAs (never touches the MXU).  By linearity of the
    # first Linear in the sample position:  W1^T (cam + t*dir) + b1 = A + t*B.
    A = (w1b[:, 0:1] * cam_ref[0:1, :] + w1b[:, 1:2] * cam_ref[1:2, :]
         + w1b[:, 2:3] * cam_ref[2:3, :] + w1b[:, 3:4])          # (H, tr)
    B = (w1b[:, 0:1] * dir_ref[0:1, :] + w1b[:, 1:2] * dir_ref[1:2, :]
         + w1b[:, 2:3] * dir_ref[2:3, :])                        # (H, tr)
    w2 = w2_ref[...].astype(mxu_dtype)                           # (H,H)  resident
    w3 = w3_ref[...].astype(mxu_dtype)                           # (8,H)  row0 = head
    # hoisted lane-broadcast (JAX does not CSE broadcast_in_dim inside the loop)
    b2c = jnp.broadcast_to(b2_ref[...], (H, s_chunk * tr))       # (H, S*tr)

    def softplus_act(x):
        return _softplus(x.astype(act_dtype))

    def chunk_body(c, acc):
        base = pl.multiple_of(c * s_chunk, s_chunk)
        zs, ds = [], []
        for s in range(s_chunk):                 # tiny static unroll (slab assembly)
            t_s = t_ref[pl.ds(base + s, 1), :]        # (1, tr)
            t_n = t_ref[pl.ds(base + s + 1, 1), :]    # (1, tr)
            zs.append(A + t_s * B)                    # first Linear, pure VPU FMAs
            ds.append(t_n - t_s)
        z1 = jnp.concatenate(zs, axis=1)              # (H, S*tr), lane-tile aligned
        delta = jnp.concatenate(ds, axis=1)           # (1, S*tr)

        h1 = softplus_act(z1).astype(mxu_dtype)
        z2 = jnp.dot(w2, h1, preferred_element_type=jnp.float32) + b2c
        h2 = softplus_act(z2).astype(mxu_dtype)
        sdf = jnp.dot(w3, h2, preferred_element_type=jnp.float32)[0:1, :] + b3

        # volSDF sigma with a single exp (no overflow in a dead branch)
        e = jnp.exp((-jnp.abs(sdf) * inv_beta).astype(act_dtype)).astype(jnp.float32)
        sigma = inv_beta * jnp.where(sdf >= 0.0, 0.5 * e, 1.0 - 0.5 * e)
        contrib = sigma * delta                       # (1, S*tr)
        for s in range(s_chunk):                      # fold S lane-blocks into acc
            acc = acc + contrib[:, s * tr:(s + 1) * tr]
        return acc

    acc = lax.fori_loop(0, n_chunks, chunk_body, jnp.zeros((1, tr), jnp.float32))
    # res = 1 - prod_s(1 - occ_s) = 1 - exp(-sum_s sigma_s * delta_s); padded samples
    # were given delta == 0 and contribute nothing.  Zero invalid / padded rays.
    o_ref[...] = (1.0 - jnp.exp(-acc)) * valid_ref[...]


def fused_occlusion_pallas(t_samples, cam_t, dir_t, valid_mask, params,
                           *, tr=None, s_chunk=4,
                           mxu_dtype=jnp.float32, act_dtype=jnp.float32):
    """Fused SDF-MLP + volSDF opacity reduction.

    t_samples: (Ns, R) sample distances (rays on the last axis);
    cam_t / dir_t: (3, R);  valid_mask: (R,) bool.  Returns (R,) occlusion.
    mxu_dtype / act_dtype: per-generation knobs (v6e/v7x: both bf16; v5e: bf16 MXU
    operands only, f32 activations).  Defaults keep f32 for exact cross-gen parity.
    """
    Ns, R = t_samples.shape
    H = params["w2"].shape[0]

    if tr is None:
        # largest 128-multiple ray tile that still leaves >= 2 grid steps (so
        # dimension_semantics=("parallel",) can use both v7x TCs), capped at 1024
        tr = int(min(1024, max(128, (R // 2) // 128 * 128)))
    assert tr % 128 == 0
    nt = pl.cdiv(R, tr)
    Rp = nt * tr

    # Number of sigma samples processed = ceil((Ns-1)/S)*S.  Extra samples get
    # delta == 0 by replicating the last t row, so they contribute exactly nothing.
    n_proc = max(s_chunk, -(-(Ns - 1) // s_chunk) * s_chunk)
    n_chunks = n_proc // s_chunk
    n_rows = n_proc + 1

    t_T = t_samples.astype(jnp.float32)
    if n_rows > Ns:
        t_T = jnp.concatenate(
            [t_T, jnp.broadcast_to(t_T[-1:, :], (n_rows - Ns, R))], axis=0)
    cam_t = cam_t.astype(jnp.float32)
    dir_t = dir_t.astype(jnp.float32)
    if Rp != R:
        pad = Rp - R
        t_T = jnp.pad(t_T, ((0, 0), (0, pad)))
        cam_t = jnp.pad(cam_t, ((0, 0), (0, pad)))
        dir_t = jnp.pad(dir_t, ((0, 0), (0, pad)))
        valid_mask = jnp.pad(valid_mask, (0, pad))
    valid = valid_mask.astype(jnp.float32).reshape(1, Rp)

    # packed weights (fewer operands / DMAs): [W1^T | b1], b2, sdf head padded to 8 rows
    w1b = jnp.concatenate([params["w1"].T, params["b1"].reshape(H, 1)],
                          axis=1).astype(jnp.float32)            # (H, 4)
    b2 = params["b2"].reshape(H, 1).astype(jnp.float32)          # (H, 1)
    w3p = jnp.zeros((8, H), jnp.float32).at[0, :].set(
        params["w3_sdf"].reshape(H).astype(jnp.float32))         # (8, H)
    w2t = params["w2"].T.astype(jnp.float32)                     # (H, H)
    scalars = jnp.stack([jnp.asarray(params["beta"], jnp.float32).reshape(()),
                         jnp.asarray(params["b3_sdf"], jnp.float32).reshape(())])

    cost = pl.CostEstimate(
        flops=int((2 * H * H + 2 * 8 * H + 20 * H + 32) * n_proc * Rp),
        transcendentals=int((4 * H + 1) * n_proc * Rp),
        bytes_accessed=int(4 * ((n_rows + 9) * Rp + nt * (H * H + 14 * H + 2))),
    )

    kernel = functools.partial(_fused_occlusion_kernel,
                               s_chunk=s_chunk, n_chunks=n_chunks,
                               mxu_dtype=mxu_dtype, act_dtype=act_dtype)

    out = pl.pallas_call(
        kernel,
        out_shape=jax.ShapeDtypeStruct((1, Rp), jnp.float32),
        grid=(nt,),
        in_specs=[
            pl.BlockSpec(memory_space=pltpu.MemorySpace.SMEM),   # [beta, b3] scalars
            pl.BlockSpec((H, 4), lambda i: (0, 0)),              # [W1^T | b1]
            pl.BlockSpec((H, 1), lambda i: (0, 0)),              # b2
            pl.BlockSpec((8, H), lambda i: (0, 0)),              # sdf head (row 0)
            pl.BlockSpec((H, H), lambda i: (0, 0)),              # W2^T
            pl.BlockSpec((n_rows, tr), lambda i: (0, i)),        # t (samples x rays)
            pl.BlockSpec((3, tr), lambda i: (0, i)),             # cam origins
            pl.BlockSpec((3, tr), lambda i: (0, i)),             # ray directions
            pl.BlockSpec((1, tr), lambda i: (0, i)),             # valid mask
        ],
        out_specs=pl.BlockSpec((1, tr), lambda i: (0, i)),       # lane-dense output
        compiler_params=pltpu.CompilerParams(dimension_semantics=("parallel",)),
        cost_estimate=cost,
    )(scalars, w1b, b2, w3p, w2t, t_T, cam_t, dir_t, valid)

    return out.reshape(Rp)[:R]


# ----------------------------------------------------------------------------
# plain-JAX glue (geometry / sphere sampling) — emits ray-on-lane layouts directly
# ----------------------------------------------------------------------------
def sample_from_spheres(spheres, origins, dirs, n_samples, near, far):
    # TODO(synk): exact NeuralWarp sample_from_spheres is not in the provided source;
    # a simplified union-of-spheres ray sampler with the same output structure
    # (samples, labels, ray_has_intersection) is used instead.  Samples are returned
    # as (Ns, R) so the kernel wrapper needs no transpose of the big array.
    centers = spheres[:, :3]
    radii = spheres[:, 3]
    oc = origins[:, None, :] - centers[None, :, :]            # (R, K, 3)
    b = jnp.sum(oc * dirs[:, None, :], axis=-1)               # (R, K)
    c = jnp.sum(oc * oc, axis=-1) - radii[None, :] ** 2
    disc = b * b - c
    hit = disc > 0
    sq = jnp.sqrt(jnp.maximum(disc, 0.0))
    t0 = jnp.clip(-b - sq, near, far)
    t1 = jnp.clip(-b + sq, near, far)
    hit = hit & (t1 > t0)
    ray_has_intersection = jnp.any(hit, axis=-1)              # (R,)
    tmin = jnp.min(jnp.where(hit, t0, jnp.inf), axis=-1)
    tmax = jnp.max(jnp.where(hit, t1, -jnp.inf), axis=-1)
    tmin = jnp.where(ray_has_intersection, tmin, 0.0)
    tmax = jnp.where(ray_has_intersection, tmax, 0.0)
    u = jnp.linspace(0.0, 1.0, n_samples)
    samples = tmin[None, :] + u[:, None] * (tmax - tmin)[None, :]     # (Ns, R)
    inside = (hit[None, :, :]
              & (samples[:, :, None] >= t0[None, :, :])
              & (samples[:, :, None] <= t1[None, :, :]))
    label = jnp.argmax(inside.astype(jnp.int32), axis=-1)             # (Ns, R)
    return samples, label, ray_has_intersection


class OcclusionDetectorSpheresPallas:
    def __init__(self, params, min_distance, init_samples, n_iterations, epsilon=0.1,
                 *, mxu_dtype=jnp.float32, act_dtype=jnp.float32):
        if n_iterations != 0:
            raise NotImplementedError(
                "upsample_T resampling (n_iterations > 0) is not supported")
        self.params = params
        self.min_distance = min_distance
        self.init_samples = init_samples
        self.nb_iter = n_iterations
        self.epsilon = epsilon
        self.mxu_dtype = mxu_dtype
        self.act_dtype = act_dtype

    def __call__(self, cam_locs, intersection_points, in_src_im, spheres):
        Nc = cam_locs.shape[0]
        Np = intersection_points.shape[0]
        Ns = self.init_samples

        rays = intersection_points[:, None, :] - cam_locs[None, :, :]   # (Np, Nc, 3)
        norm = jnp.linalg.norm(rays, axis=-1)
        max_dist = norm - self.min_distance                              # (Np, Nc)
        ray_directions = rays / jnp.maximum(norm[..., None], 1e-12)      # F.normalize

        # i == 0 iteration of the sampling loop (nb_iter == 0)
        origins = jnp.broadcast_to(cam_locs[None, :, :], (Np, Nc, 3)).reshape(-1, 3)
        dirs = ray_directions.reshape(-1, 3)
        near = jnp.zeros_like(max_dist).reshape(-1, 1)
        far = max_dist.reshape(-1, 1)
        samples_t, _interval_label, ray_has_intersection = sample_from_spheres(
            spheres, origins, dirs, Ns, near, far)                       # (Ns, R)
        # fill_tensor: zero rays without an intersection (rays on the lane axis)
        pts_intervals_t = jnp.where(ray_has_intersection[None, :], samples_t, 0.0)

        # The per-sample sdf_to_compute masking only affects rays whose output is
        # zeroed by the final mask anyway, so it is absorbed into `valid` here.
        valid_mask = in_src_im.reshape(-1) & ray_has_intersection

        res = fused_occlusion_pallas(
            pts_intervals_t, origins.T, dirs.T, valid_mask, self.params,
            mxu_dtype=self.mxu_dtype, act_dtype=self.act_dtype)
        return res.reshape(Np, Nc)


# ----------------------------------------------------------------------------
# pure-JAX reference (same math, no Pallas) for a sanity check
# ----------------------------------------------------------------------------
def reference_forward(params, min_distance, init_samples,
                      cam_locs, intersection_points, in_src_im, spheres):
    Nc = cam_locs.shape[0]
    Np = intersection_points.shape[0]
    Ns = init_samples
    rays = intersection_points[:, None, :] - cam_locs[None, :, :]
    norm = jnp.linalg.norm(rays, axis=-1)
    max_dist = norm - min_distance
    ray_directions = rays / jnp.maximum(norm[..., None], 1e-12)
    origins = jnp.broadcast_to(cam_locs[None, :, :], (Np, Nc, 3)).reshape(-1, 3)
    dirs = ray_directions.reshape(-1, 3)
    samples_t, _, ray_has_intersection = sample_from_spheres(
        spheres, origins, dirs, Ns,
        jnp.zeros_like(max_dist).reshape(-1, 1), max_dist.reshape(-1, 1))
    samples = samples_t.T                                             # (R, Ns)
    pts_intervals = jnp.where(ray_has_intersection[:, None], samples, 0.0
                              ).reshape(Np, Nc, Ns)
    points = (cam_locs[None, :, None, :]
              + pts_intervals[..., None] * ray_directions[:, :, None, :])
    x = points.reshape(-1, 3)
    h1 = _softplus(x @ params["w1"] + params["b1"])
    h2 = _softplus(h1 @ params["w2"] + params["b2"])
    sdf = (h2 @ params["w3_sdf"] + params["b3_sdf"]).reshape(Np, Nc, Ns)
    sdf = jnp.where(in_src_im[..., None], sdf, 0.0)
    inv_beta = 1.0 / params["beta"]
    sigma = inv_beta * jnp.where(
        sdf >= 0.0, 0.5 * jnp.exp(-sdf * inv_beta), 1.0 - 0.5 * jnp.exp(sdf * inv_beta))
    delta = pts_intervals[..., 1:] - pts_intervals[..., :-1]
    occ = 1.0 - jnp.exp(-sigma[..., :-1] * delta)
    res = 1.0 - jnp.prod(1.0 - occ, axis=-1)
    valid = in_src_im & ray_has_intersection.reshape(Np, Nc)
    return jnp.where(valid, res, 0.0)


# ----------------------------------------------------------------------------
if __name__ == "__main__":
    key = jax.random.PRNGKey(0)
    k_w1, k_w2, k_w3, k_b3, k_cam, k_pts, k_mask, k_sc, k_sr = jax.random.split(key, 9)

    # implicit_net parameters: Lin(3,H) -> softplus -> Lin(H,H) -> softplus -> Lin(H, 1+F)
    H, F = 32, 16
    w3_full = jax.random.normal(k_w3, (H, 1 + F), jnp.float32) / jnp.sqrt(H)
    b3_full = 0.01 * jax.random.normal(k_b3, (1 + F,), jnp.float32)
    params = {
        "w1": 0.5 * jax.random.normal(k_w1, (3, H), jnp.float32),
        "b1": jnp.zeros((1, H), jnp.float32),
        "w2": jax.random.normal(k_w2, (H, H), jnp.float32) / jnp.sqrt(H),
        "b2": jnp.zeros((1, H), jnp.float32),
        "w3_sdf": w3_full[:, :1],                      # only the SDF head column is used
        "b3_sdf": b3_full[:1].reshape(1, 1),
        "beta": jnp.float32(0.1),                      # implicit_net.beta()
    }

    # module config and inputs (R = Np*Nc = 256 rays -> 2 parallel grid steps at tr=128)
    Nc, Np, Ns, K = 8, 32, 32, 4
    min_distance, n_iterations, epsilon = 0.1, 0, 0.1

    cam_locs = 3.0 * jax.random.normal(k_cam, (Nc, 3), jnp.float32)
    intersection_points = 0.5 * jax.random.normal(k_pts, (Np, 3), jnp.float32)
    in_src_im = jax.random.bernoulli(k_mask, 0.8, (Np, Nc))
    sphere_centers = 0.5 * jax.random.normal(k_sc, (K, 3), jnp.float32)
    sphere_radii = jax.random.uniform(k_sr, (K, 1), jnp.float32, 0.8, 1.5)
    spheres = jnp.concatenate([sphere_centers, sphere_radii], axis=-1)

    detector = OcclusionDetectorSpheresPallas(
        params, min_distance, Ns, n_iterations, epsilon)

    out = detector(cam_locs, intersection_points, in_src_im, spheres)
    out = jax.block_until_ready(out)

    ref = reference_forward(params, min_distance, Ns,
                            cam_locs, intersection_points, in_src_im, spheres)
    np.testing.assert_allclose(np.asarray(out), np.asarray(ref),
                               rtol=1e-2, atol=1e-3)
    assert out.shape == (Np, Nc)
    print("KERNEL_OK")
</pallas_src>

<mosaic_0001>
module attributes {stable_mosaic.version = 11 : i64} {
  func.func @_fused_occlusion_kernel(%arg0: i32, %arg1: memref<2xf32, #tpu.memory_space<smem>>, %arg2: memref<32x4xf32, #tpu.memory_space<vmem>>, %arg3: memref<32x1xf32, #tpu.memory_space<vmem>>, %arg4: memref<8x32xf32, #tpu.memory_space<vmem>>, %arg5: memref<32x32xf32, #tpu.memory_space<vmem>>, %arg6: memref<33x128xf32, #tpu.memory_space<vmem>>, %arg7: memref<3x128xf32, #tpu.memory_space<vmem>>, %arg8: memref<3x128xf32, #tpu.memory_space<vmem>>, %arg9: memref<1x128xf32, #tpu.memory_space<vmem>>, %arg10: memref<1x128xf32, #tpu.memory_space<vmem>>) attributes {dimension_semantics = [#tpu.dimension_semantics<parallel>], iteration_bounds = array<i64: 2>, scalar_prefetch = 0 : i64, scratch_operands = 0 : i64, tpu.core_type = #tpu.core_type<tc>, window_params = [{transform_indices = @transform_0, window_bounds = array<i64: 2>}, {pipeline_mode = #tpu.pipeline_mode<synchronous>, transform_indices = @transform_1, window_bounds = array<i64: 32, 4>}, {pipeline_mode = #tpu.pipeline_mode<synchronous>, transform_indices = @transform_2, window_bounds = array<i64: 32, 1>}, {pipeline_mode = #tpu.pipeline_mode<synchronous>, transform_indices = @transform_3, window_bounds = array<i64: 8, 32>}, {pipeline_mode = #tpu.pipeline_mode<synchronous>, transform_indices = @transform_4, window_bounds = array<i64: 32, 32>}, {transform_indices = @transform_5, window_bounds = array<i64: 33, 128>}, {transform_indices = @transform_6, window_bounds = array<i64: 3, 128>}, {transform_indices = @transform_7, window_bounds = array<i64: 3, 128>}, {transform_indices = @transform_8, window_bounds = array<i64: 1, 128>}, {transform_indices = @transform_9, window_bounds = array<i64: 1, 128>}]} {
    %c0 = arith.constant 0 : index
    %0 = memref.load %arg1[%c0] : memref<2xf32, #tpu.memory_space<smem>>
    %cst = arith.constant 1.000000e+00 : f32
    %1 = arith.divf %cst, %0 : f32
    %c1 = arith.constant 1 : index
    %2 = memref.load %arg1[%c1] : memref<2xf32, #tpu.memory_space<smem>>
    %c0_0 = arith.constant 0 : index
    %c0_1 = arith.constant 0 : index
    %3 = vector.load %arg2[%c0_0, %c0_1] : memref<32x4xf32, #tpu.memory_space<vmem>>, vector<32x4xf32>
    %4 = vector.extract_strided_slice %3 {offsets = [0, 0], sizes = [32, 1], strides = [1, 1]} : vector<32x4xf32> to vector<32x1xf32>
    %c0_2 = arith.constant 0 : index
    %c0_3 = arith.constant 0 : index
    %5 = vector.load %arg7[%c0_2, %c0_3] : memref<3x128xf32, #tpu.memory_space<vmem>>, vector<1x128xf32>
    %6 = vector.broadcast %4 : vector<32x1xf32> to vector<32x128xf32>
    %7 = vector.broadcast %5 : vector<1x128xf32> to vector<32x128xf32>
    %8 = arith.mulf %6, %7 : vector<32x128xf32>
    %9 = vector.extract_strided_slice %3 {offsets = [0, 1], sizes = [32, 1], strides = [1, 1]} : vector<32x4xf32> to vector<32x1xf32>
    %c1_4 = arith.constant 1 : index
    %c0_5 = arith.constant 0 : index
    %10 = vector.load %arg7[%c1_4, %c0_5] : memref<3x128xf32, #tpu.memory_space<vmem>>, vector<1x128xf32>
    %11 = vector.broadcast %9 : vector<32x1xf32> to vector<32x128xf32>
    %12 = vector.broadcast %10 : vector<1x128xf32> to vector<32x128xf32>
    %13 = arith.mulf %11, %12 : vector<32x128xf32>
    %14 = arith.addf %8, %13 : vector<32x128xf32>
    %15 = vector.extract_strided_slice %3 {offsets = [0, 2], sizes = [32, 1], strides = [1, 1]} : vector<32x4xf32> to vector<32x1xf32>
    %c2 = arith.constant 2 : index
    %c0_6 = arith.constant 0 : index
    %16 = vector.load %arg7[%c2, %c0_6] : memref<3x128xf32, #tpu.memory_space<vmem>>, vector<1x128xf32>
    %17 = vector.broadcast %15 : vector<32x1xf32> to vector<32x128xf32>
    %18 = vector.broadcast %16 : vector<1x128xf32> to vector<32x128xf32>
    %19 = arith.mulf %17, %18 : vector<32x128xf32>
    %20 = arith.addf %14, %19 : vector<32x128xf32>
    %21 = vector.extract_strided_slice %3 {offsets = [0, 3], sizes = [32, 1], strides = [1, 1]} : vector<32x4xf32> to vector<32x1xf32>
    %22 = vector.broadcast %21 : vector<32x1xf32> to vector<32x128xf32>
    %23 = arith.addf %20, %22 : vector<32x128xf32>
    %24 = vector.extract_strided_slice %3 {offsets = [0, 0], sizes = [32, 1], strides = [1, 1]} : vector<32x4xf32> to vector<32x1xf32>
    %c0_7 = arith.constant 0 : index
    %c0_8 = arith.constant 0 : index
    %25 = vector.load %arg8[%c0_7, %c0_8] : memref<3x128xf32, #tpu.memory_space<vmem>>, vector<1x128xf32>
    %26 = vector.broadcast %24 : vector<32x1xf32> to vector<32x128xf32>
    %27 = vector.broadcast %25 : vector<1x128xf32> to vector<32x128xf32>
    %28 = arith.mulf %26, %27 : vector<32x128xf32>
    %29 = vector.extract_strided_slice %3 {offsets = [0, 1], sizes = [32, 1], strides = [1, 1]} : vector<32x4xf32> to vector<32x1xf32>
    %c1_9 = arith.constant 1 : index
    %c0_10 = arith.constant 0 : index
    %30 = vector.load %arg8[%c1_9, %c0_10] : memref<3x128xf32, #tpu.memory_space<vmem>>, vector<1x128xf32>
    %31 = vector.broadcast %29 : vector<32x1xf32> to vector<32x128xf32>
    %32 = vector.broadcast %30 : vector<1x128xf32> to vector<32x128xf32>
    %33 = arith.mulf %31, %32 : vector<32x128xf32>
    %34 = arith.addf %28, %33 : vector<32x128xf32>
    %35 = vector.extract_strided_slice %3 {offsets = [0, 2], sizes = [32, 1], strides = [1, 1]} : vector<32x4xf32> to vector<32x1xf32>
    %c2_11 = arith.constant 2 : index
    %c0_12 = arith.constant 0 : index
    %36 = vector.load %arg8[%c2_11, %c0_12] : memref<3x128xf32, #tpu.memory_space<vmem>>, vector<1x128xf32>
    %37 = vector.broadcast %35 : vector<32x1xf32> to vector<32x128xf32>
    %38 = vector.broadcast %36 : vector<1x128xf32> to vector<32x128xf32>
    %39 = arith.mulf %37, %38 : vector<32x128xf32>
    %40 = arith.addf %34, %39 : vector<32x128xf32>
    %c0_13 = arith.constant 0 : index
    %c0_14 = arith.constant 0 : index
    %41 = vector.load %arg5[%c0_13, %c0_14] : memref<32x32xf32, #tpu.memory_space<vmem>>, vector<32x32xf32>
    %c0_15 = arith.constant 0 : index
    %c0_16 = arith.constant 0 : index
    %42 = vector.load %arg4[%c0_15, %c0_16] : memref<8x32xf32, #tpu.memory_space<vmem>>, vector<8x32xf32>
    %c0_17 = arith.constant 0 : index
    %c0_18 = arith.constant 0 : index
    %43 = vector.load %arg3[%c0_17, %c0_18] : memref<32x1xf32, #tpu.memory_space<vmem>>, vector<32x1xf32>
    %44 = vector.shape_cast %43 : vector<32x1xf32> to vector<32x1xf32>
    %45 = vector.broadcast %44 : vector<32x1xf32> to vector<32x512xf32>
    %cst_19 = arith.constant 0.000000e+00 : f32
    %46 = vector.broadcast %cst_19 : f32 to vector<1x128xf32>
    %c0_i32 = arith.constant 0 : i32
    %c8_i32 = arith.constant 8 : i32
    %47 = arith.addi %c0_i32, %c8_i32 : i32
    %c1_i32 = arith.constant 1 : i32
    %48 = scf.for %arg11 = %c0_i32 to %47 step %c1_i32 iter_args(%arg12 = %46) -> (vector<1x128xf32>)  : i32 {
      %c4_i32 = arith.constant 4 : i32
      %57 = arith.muli %arg11, %c4_i32 : i32
      %58 = tpu.assume_multiple %57, 4 : i32
      %c0_i32_27 = arith.constant 0 : i32
      %59 = arith.addi %58, %c0_i32_27 : i32
      %60 = arith.index_cast %59 : i32 to index
      %c0_28 = arith.constant 0 : index
      %61 = vector.load %arg6[%60, %c0_28] : memref<33x128xf32, #tpu.memory_space<vmem>>, vector<1x128xf32>
      %c0_i32_29 = arith.constant 0 : i32
      %62 = arith.addi %58, %c0_i32_29 : i32
      %c1_i32_30 = arith.constant 1 : i32
      %63 = arith.addi %62, %c1_i32_30 : i32
      %64 = arith.index_cast %63 : i32 to index
      %c0_31 = arith.constant 0 : index
      %65 = vector.load %arg6[%64, %c0_31] : memref<33x128xf32, #tpu.memory_space<vmem>>, vector<1x128xf32>
      %66 = vector.broadcast %61 : vector<1x128xf32> to vector<32x128xf32>
      %67 = arith.mulf %66, %40 : vector<32x128xf32>
      %68 = arith.addf %23, %67 : vector<32x128xf32>
      %69 = arith.subf %65, %61 : vector<1x128xf32>
      %c1_i32_32 = arith.constant 1 : i32
      %70 = arith.addi %58, %c1_i32_32 : i32
      %71 = arith.index_cast %70 : i32 to index
      %c0_33 = arith.constant 0 : index
      %72 = vector.load %arg6[%71, %c0_33] : memref<33x128xf32, #tpu.memory_space<vmem>>, vector<1x128xf32>
      %c1_i32_34 = arith.constant 1 : i32
      %73 = arith.addi %58, %c1_i32_34 : i32
      %c1_i32_35 = arith.constant 1 : i32
      %74 = arith.addi %73, %c1_i32_35 : i32
      %75 = arith.index_cast %74 : i32 to index
      %c0_36 = arith.constant 0 : index
      %76 = vector.load %arg6[%75, %c0_36] : memref<33x128xf32, #tpu.memory_space<vmem>>, vector<1x128xf32>
      %77 = vector.broadcast %72 : vector<1x128xf32> to vector<32x128xf32>
      %78 = arith.mulf %77, %40 : vector<32x128xf32>
      %79 = arith.addf %23, %78 : vector<32x128xf32>
      %80 = arith.subf %76, %72 : vector<1x128xf32>
      %c2_i32 = arith.constant 2 : i32
      %81 = arith.addi %58, %c2_i32 : i32
      %82 = arith.index_cast %81 : i32 to index
      %c0_37 = arith.constant 0 : index
      %83 = vector.load %arg6[%82, %c0_37] : memref<33x128xf32, #tpu.memory_space<vmem>>, vector<1x128xf32>
      %c2_i32_38 = arith.constant 2 : i32
      %84 = arith.addi %58, %c2_i32_38 : i32
      %c1_i32_39 = arith.constant 1 : i32
      %85 = arith.addi %84, %c1_i32_39 : i32
      %86 = arith.index_cast %85 : i32 to index
      %c0_40 = arith.constant 0 : index
      %87 = vector.load %arg6[%86, %c0_40] : memref<33x128xf32, #tpu.memory_space<vmem>>, vector<1x128xf32>
      %88 = vector.broadcast %83 : vector<1x128xf32> to vector<32x128xf32>
      %89 = arith.mulf %88, %40 : vector<32x128xf32>
      %90 = arith.addf %23, %89 : vector<32x128xf32>
      %91 = arith.subf %87, %83 : vector<1x128xf32>
      %c3_i32 = arith.constant 3 : i32
      %92 = arith.addi %58, %c3_i32 : i32
      %93 = arith.index_cast %92 : i32 to index
      %c0_41 = arith.constant 0 : index
      %94 = vector.load %arg6[%93, %c0_41] : memref<33x128xf32, #tpu.memory_space<vmem>>, vector<1x128xf32>
      %c3_i32_42 = arith.constant 3 : i32
      %95 = arith.addi %58, %c3_i32_42 : i32
      %c1_i32_43 = arith.constant 1 : i32
      %96 = arith.addi %95, %c1_i32_43 : i32
      %97 = arith.index_cast %96 : i32 to index
      %c0_44 = arith.constant 0 : index
      %98 = vector.load %arg6[%97, %c0_44] : memref<33x128xf32, #tpu.memory_space<vmem>>, vector<1x128xf32>
      %99 = vector.broadcast %94 : vector<1x128xf32> to vector<32x128xf32>
      %100 = arith.mulf %99, %40 : vector<32x128xf32>
      %101 = arith.addf %23, %100 : vector<32x128xf32>
      %102 = arith.subf %98, %94 : vector<1x128xf32>
      %103 = tpu.concatenate %68, %79, %90, %101 in 1 : vector<32x128xf32>, vector<32x128xf32>, vector<32x128xf32>, vector<32x128xf32> -> vector<32x512xf32>
      %104 = tpu.concatenate %69, %80, %91, %102 in 1 : vector<1x128xf32>, vector<1x128xf32>, vector<1x128xf32>, vector<1x128xf32> -> vector<1x512xf32>
      %cst_45 = arith.constant 2.000000e+01 : f32
      %105 = vector.broadcast %cst_45 : f32 to vector<32x512xf32>
      %106 = arith.cmpf ogt, %103, %105 : vector<32x512xf32>
      %cst_46 = arith.constant 2.000000e+01 : f32
      %107 = vector.broadcast %cst_46 : f32 to vector<32x512xf32>
      %108 = arith.minimumf %103, %107 : vector<32x512xf32>
      %109 = math.exp %108 : vector<32x512xf32>
      %cst_47 = arith.constant 1.000000e+00 : f32
      %110 = vector.broadcast %cst_47 : f32 to vector<32x512xf32>
      %111 = arith.addf %110, %109 : vector<32x512xf32>
      %112 = math.log %111 : vector<32x512xf32>
      %113 = arith.select %106, %103, %112 : vector<32x512xi1>, vector<32x512xf32>
      %cst_48 = arith.constant dense<0.000000e+00> : vector<32x512xf32>
      %114 = tpu.matmul %41, %113, %cst_48 {dimension_numbers = #tpu.dot_dimension_numbers<[1], [0], [0], [1], [0, 0, 1, 1], [], []>} : vector<32x32xf32>, vector<32x512xf32>, vector<32x512xf32> -> vector<32x512xf32>
      %115 = arith.addf %114, %45 : vector<32x512xf32>
      %cst_49 = arith.constant 2.000000e+01 : f32
      %116 = vector.broadcast %cst_49 : f32 to vector<32x512xf32>
      %117 = arith.cmpf ogt, %115, %116 : vector<32x512xf32>
      %cst_50 = arith.constant 2.000000e+01 : f32
      %118 = vector.broadcast %cst_50 : f32 to vector<32x512xf32>
      %119 = arith.minimumf %115, %118 : vector<32x512xf32>
      %120 = math.exp %119 : vector<32x512xf32>
      %cst_51 = arith.constant 1.000000e+00 : f32
      %121 = vector.broadcast %cst_51 : f32 to vector<32x512xf32>
      %122 = arith.addf %121, %120 : vector<32x512xf32>
      %123 = math.log %122 : vector<32x512xf32>
      %124 = arith.select %117, %115, %123 : vector<32x512xi1>, vector<32x512xf32>
      %cst_52 = arith.constant dense<0.000000e+00> : vector<8x512xf32>
      %125 = tpu.matmul %42, %124, %cst_52 {dimension_numbers = #tpu.dot_dimension_numbers<[1], [0], [0], [1], [0, 0, 1, 1], [], []>} : vector<8x32xf32>, vector<32x512xf32>, vector<8x512xf32> -> vector<8x512xf32>
      %126 = vector.extract_strided_slice %125 {offsets = [0, 0], sizes = [1, 512], strides = [1, 1]} : vector<8x512xf32> to vector<1x512xf32>
      %127 = vector.broadcast %2 : f32 to vector<1x512xf32>
      %128 = arith.addf %126, %127 : vector<1x512xf32>
      %129 = math.absf %128 : vector<1x512xf32>
      %cst_53 = arith.constant 0.000000e+00 : f32
      %130 = vector.broadcast %cst_53 : f32 to vector<1x512xf32>
      %131 = arith.subf %130, %129 : vector<1x512xf32>
      %132 = vector.broadcast %1 : f32 to vector<1x512xf32>
      %133 = arith.mulf %131, %132 : vector<1x512xf32>
      %134 = math.exp %133 : vector<1x512xf32>
      %cst_54 = arith.constant 0.000000e+00 : f32
      %135 = vector.broadcast %cst_54 : f32 to vector<1x512xf32>
      %136 = arith.cmpf oge, %128, %135 : vector<1x512xf32>
      %cst_55 = arith.constant 5.000000e-01 : f32
      %137 = vector.broadcast %cst_55 : f32 to vector<1x512xf32>
      %138 = arith.mulf %137, %134 : vector<1x512xf32>
      %cst_56 = arith.constant 5.000000e-01 : f32
      %139 = vector.broadcast %cst_56 : f32 to vector<1x512xf32>
      %140 = arith.mulf %139, %134 : vector<1x512xf32>
      %cst_57 = arith.constant 1.000000e+00 : f32
      %141 = vector.broadcast %cst_57 : f32 to vector<1x512xf32>
      %142 = arith.subf %141, %140 : vector<1x512xf32>
      %143 = arith.select %136, %138, %142 : vector<1x512xi1>, vector<1x512xf32>
      %144 = vector.broadcast %1 : f32 to vector<1x512xf32>
      %145 = arith.mulf %144, %143 : vector<1x512xf32>
      %146 = arith.mulf %145, %104 : vector<1x512xf32>
      %147 = vector.extract_strided_slice %146 {offsets = [0, 0], sizes = [1, 128], strides = [1, 1]} : vector<1x512xf32> to vector<1x128xf32>
      %148 = arith.addf %arg12, %147 : vector<1x128xf32>
      %149 = vector.extract_strided_slice %146 {offsets = [0, 128], sizes = [1, 128], strides = [1, 1]} : vector<1x512xf32> to vector<1x128xf32>
      %150 = arith.addf %148, %149 : vector<1x128xf32>
      %151 = vector.extract_strided_slice %146 {offsets = [0, 256], sizes = [1, 128], strides = [1, 1]} : vector<1x512xf32> to vector<1x128xf32>
      %152 = arith.addf %150, %151 : vector<1x128xf32>
      %153 = vector.extract_strided_slice %146 {offsets = [0, 384], sizes = [1, 128], strides = [1, 1]} : vector<1x512xf32> to vector<1x128xf32>
      %154 = arith.addf %152, %153 : vector<1x128xf32>
      scf.yield %154 : vector<1x128xf32>
    }
    %c8_i32_20 = arith.constant 8 : i32
    %cst_21 = arith.constant 0.000000e+00 : f32
    %49 = vector.broadcast %cst_21 : f32 to vector<1x128xf32>
    %50 = arith.subf %49, %48 : vector<1x128xf32>
    %51 = math.exp %50 : vector<1x128xf32>
    %cst_22 = arith.constant 1.000000e+00 : f32
    %52 = vector.broadcast %cst_22 : f32 to vector<1x128xf32>
    %53 = arith.subf %52, %51 : vector<1x128xf32>
    %c0_23 = arith.constant 0 : index
    %c0_24 = arith.constant 0 : index
    %54 = vector.load %arg9[%c0_23, %c0_24] : memref<1x128xf32, #tpu.memory_space<vmem>>, vector<1x128xf32>
    %55 = arith.mulf %53, %54 : vector<1x128xf32>
    %c0_25 = arith.constant 0 : index
    %c0_26 = arith.constant 0 : index
    %56 = vector.load %arg10[%c0_25, %c0_26] : memref<1x128xf32, #tpu.memory_space<vmem>>, vector<1x128xf32>
    tpu.vector_store %arg10[%c0_25, %c0_26], %55 {strides = array<i32>} : memref<1x128xf32, #tpu.memory_space<vmem>>, vector<1x128xf32>,
    return
  }
  func.func @transform_0(%arg0: i32) -> i32 {
    %c0_i32 = arith.constant 0 : i32
    %c0_i32_0 = arith.constant 0 : i32
    return %c0_i32 : i32
  }
  func.func @transform_1(%arg0: i32) -> (i32, i32) {
    %c0_i32 = arith.constant 0 : i32
    %c0_i32_0 = arith.constant 0 : i32
    %c0_i32_1 = arith.constant 0 : i32
    return %c0_i32, %c0_i32_0 : i32, i32
  }
  func.func @transform_2(%arg0: i32) -> (i32, i32) {
    %c0_i32 = arith.constant 0 : i32
    %c0_i32_0 = arith.constant 0 : i32
    %c0_i32_1 = arith.constant 0 : i32
    return %c0_i32, %c0_i32_0 : i32, i32
  }
  func.func @transform_3(%arg0: i32) -> (i32, i32) {
    %c0_i32 = arith.constant 0 : i32
    %c0_i32_0 = arith.constant 0 : i32
    %c0_i32_1 = arith.constant 0 : i32
    return %c0_i32, %c0_i32_0 : i32, i32
  }
  func.func @transform_4(%arg0: i32) -> (i32, i32) {
    %c0_i32 = arith.constant 0 : i32
    %c0_i32_0 = arith.constant 0 : i32
    %c0_i32_1 = arith.constant 0 : i32
    return %c0_i32, %c0_i32_0 : i32, i32
  }
  func.func @transform_5(%arg0: i32) -> (i32, i32) {
    %c0_i32 = arith.constant 0 : i32
    %c0_i32_0 = arith.constant 0 : i32
    return %c0_i32, %arg0 : i32, i32
  }
  func.func @transform_6(%arg0: i32) -> (i32, i32) {
    %c0_i32 = arith.constant 0 : i32
    %c0_i32_0 = arith.constant 0 : i32
    return %c0_i32, %arg0 : i32, i32
  }
  func.func @transform_7(%arg0: i32) -> (i32, i32) {
    %c0_i32 = arith.constant 0 : i32
    %c0_i32_0 = arith.constant 0 : i32
    return %c0_i32, %arg0 : i32, i32
  }
  func.func @transform_8(%arg0: i32) -> (i32, i32) {
    %c0_i32 = arith.constant 0 : i32
    %c0_i32_0 = arith.constant 0 : i32
    return %c0_i32, %arg0 : i32, i32
  }
  func.func @transform_9(%arg0: i32) -> (i32, i32) {
    %c0_i32 = arith.constant 0 : i32
    %c0_i32_0 = arith.constant 0 : i32
    return %c0_i32, %arg0 : i32, i32
  }
}

</mosaic_0001>

<llo_original>
// kernel: tpu_custom_call.1
$region0: #{tpu_custom_call.1}
  #allocation0 [shape = 'u32[]', space=smem, size = 0x4, offset = 0x4, fixed_abs, tag = 'smem constant byte address 0x4 - core index']
  #allocation1 [shape = 'u32[144,128]{1,0:T(1,128)}', space=vmem, size = 0x12000, scoped, tag = 'internal scratch']
  %s0 = inlined_call_operand.vmem [shape: f32[2], index: 0, kind: input, shape index: {}]
  %s1 = inlined_call_operand.vmem [shape: f32[32,4], index: 1, kind: input, shape index: {}]
  %s2 = inlined_call_operand.vmem [shape: f32[32,1], index: 2, kind: input, shape index: {}]
  %s3 = inlined_call_operand.vmem [shape: f32[8,32], index: 3, kind: input, shape index: {}]
  %s4 = inlined_call_operand.vmem [shape: f32[32,32], index: 4, kind: input, shape index: {}]
  %s5 = inlined_call_operand.hbm [shape: f32[33,256], index: 5, kind: input, shape index: {}]
  %s6 = inlined_call_operand.vmem [shape: f32[3,256], index: 6, kind: input, shape index: {}]
  %s7 = inlined_call_operand.vmem [shape: f32[3,256], index: 7, kind: input, shape index: {}]
  %s8 = inlined_call_operand.vmem [shape: f32[1,256], index: 8, kind: input, shape index: {}]
  %s9 = inlined_call_operand.hbm [shape: f32[1,256], index: 9, kind: output, shape index: {}]
  %s10 = sld [smem:[#allocation0]]
  $region84: #{tpu_custom_call.1} parent=0
    _
  %s12 = ssub.s32 1, %s10
  %s13 = scalar_select 0, %s12, %s10
  $region1: #{tpu_custom_call.1} parent=0
    #allocation2 [shape = 'u8[512]{0}', space=smem, size = 0x200, scoped, tag = 'input window, operand 0, single buffered']
    #allocation3 [shape = 's32[2]{0}', space=sflag, size = 0x8, scoped, tag = 'scoped memory for tpu_custom_call.1']
    #allocation4 [shape = 's32[2]{0}', space=sflag, size = 0x8, scoped, tag = 'scoped memory for tpu_custom_call.1']
    #allocation5 [shape = 's32[2]{0}', space=sflag, size = 0x8, scoped, tag = 'scoped memory for tpu_custom_call.1']
    #allocation6 [shape = 'u8[40960]{0}', space=vmem, size = 0xa000, scoped, tag = 'input window, operand 5']
    #allocation7 [shape = 'u8[1024]{0}', space=vmem, size = 0x400, scoped, tag = 'output window, operand 0']
    %14 = vsyncpa [#allocation5], 0
    %15 = vsyncpa [#allocation3], 0
    %s16 = scalar_lea.sflag [#allocation3], 1
    %17 = vsyncpa %s16, 0
    %18 = vsyncpa [#allocation4], 0
    %s19 = scalar_lea.sflag [#allocation4], 1
    %20 = vsyncpa %s19, 0
    loop: start=0, step=1, limit=4
    $region2: #{tpu_custom_call.1} parent=1 // loop_pre_header
      _
    $region3: #{tpu_custom_call.1} parent=1 // loop_header
      %s22 = sphi 0, %s26
      %p23 = scmp.ge.s32.totalorder %s22, 4
      %s30 = sphi 0, %s30
      %s32 = sphi 0, %s30
      %s33 = sphi 0, %s32
      %s47 = sphi 0, %s33
      %s51 = sphi 0, %s51
      %s53 = sphi 0, %s51
      %s54 = sphi 0, %s53
      %s68 = sphi 0, %s54
      %s72 = sphi 0, %s72
      %s74 = sphi 0, %s72
      %s75 = sphi 0, %s74
      %s89 = sphi 0, %s75
      %s93 = sphi 0, %s93
      %s95 = sphi 0, %s93
      %s96 = sphi 0, %s95
      %s110 = sphi 0, %s96
      %s114 = sphi 0, %s114
      %s116 = sphi 0, %s114
      %s117 = sphi 0, %s116
      %s131 = sphi 0, %s117
      %s137 = sphi 0, %s139
      %s140 = sphi 0, %s137
      %s141 = sphi 0, %s140
      %s157 = sphi 0, %s141
      %s163 = sphi 0, %s165
      %s166 = sphi 0, %s163
      %s167 = sphi 0, %s166
      %s183 = sphi 0, %s167
      %s189 = sphi 0, %s191
      %s192 = sphi 0, %s189
      %s193 = sphi 0, %s192
      %s209 = sphi 0, %s193
      %s215 = sphi 0, %s217
      %s218 = sphi 0, %s215
      %s219 = sphi 0, %s218
      %s235 = sphi 0, %s219
      %s241 = sphi 0, %s243
      %s244 = sphi 0, %s241
      %s245 = sphi 0, %s244
      %s261 = sphi 0, %s245
    $region4: #{tpu_custom_call.1} parent=1 // loop_header_branch
      %25 = sbr.rel (%p23) target = $region8
    $region5: #{tpu_custom_call.1} parent=1 // loop_body
      %s27 = ssub.s32 %s22, 1
      %s28 = ssub.s32 %s22, 2
      %s29 = sadd.s32 %s22, 1
      %s31 = sadd.s32 %s30, 1
      %p34 = scmp.eq.s32.totalorder %s22, 1
      %p35 = scmp.ne.s32.totalorder %s30, %s32
      %p36 = scmp.eq.s32.totalorder %s22, 0
      %p37 = por %p35, %p36
      %p38 = scmp.ne.s32.totalorder %s30, %s32
      %p39 = scmp.eq.s32.totalorder %s27, 1
      %p40 = por %p38, %p39
      %p41 = scmp.ne.s32.totalorder %s32, %s33
      %p42 = scmp.eq.s32.totalorder %s27, 0
      %p43 = por %p41, %p42
      %p44 = scmp.ne.s32.totalorder %s32, %s33
      %p45 = scmp.eq.s32.totalorder %s28, 1
      %p46 = por %p44, %p45
      %p48 = scmp.ne.s32.totalorder %s33, %s47
      %p49 = scmp.eq.s32.totalorder %s28, 0
      %p50 = por %p48, %p49
      %s52 = sadd.s32 %s51, 1
      %p55 = scmp.eq.s32.totalorder %s22, 1
      %p56 = scmp.ne.s32.totalorder %s51, %s53
      %p57 = scmp.eq.s32.totalorder %s22, 0
      %p58 = por %p56, %p57
      %p59 = scmp.ne.s32.totalorder %s51, %s53
      %p60 = scmp.eq.s32.totalorder %s27, 1
      %p61 = por %p59, %p60
      %p62 = scmp.ne.s32.totalorder %s53, %s54
      %p63 = scmp.eq.s32.totalorder %s27, 0
      %p64 = por %p62, %p63
      %p65 = scmp.ne.s32.totalorder %s53, %s54
      %p66 = scmp.eq.s32.totalorder %s28, 1
      %p67 = por %p65, %p66
      %p69 = scmp.ne.s32.totalorder %s54, %s68
      %p70 = scmp.eq.s32.totalorder %s28, 0
      %p71 = por %p69, %p70
      %s73 = sadd.s32 %s72, 1
      %p76 = scmp.eq.s32.totalorder %s22, 1
      %p77 = scmp.ne.s32.totalorder %s72, %s74
      %p78 = scmp.eq.s32.totalorder %s22, 0
      %p79 = por %p77, %p78
      %p80 = scmp.ne.s32.totalorder %s72, %s74
      %p81 = scmp.eq.s32.totalorder %s27, 1
      %p82 = por %p80, %p81
      %p83 = scmp.ne.s32.totalorder %s74, %s75
      %p84 = scmp.eq.s32.totalorder %s27, 0
      %p85 = por %p83, %p84
      %p86 = scmp.ne.s32.totalorder %s74, %s75
      %p87 = scmp.eq.s32.totalorder %s28, 1
      %p88 = por %p86, %p87
      %p90 = scmp.ne.s32.totalorder %s75, %s89
      %p91 = scmp.eq.s32.totalorder %s28, 0
      %p92 = por %p90, %p91
      %s94 = sadd.s32 %s93, 1
      %p97 = scmp.eq.s32.totalorder %s22, 1
      %p98 = scmp.ne.s32.totalorder %s93, %s95
      %p99 = scmp.eq.s32.totalorder %s22, 0
      %p100 = por %p98, %p99
      %p101 = scmp.ne.s32.totalorder %s93, %s95
      %p102 = scmp.eq.s32.totalorder %s27, 1
      %p103 = por %p101, %p102
      %p104 = scmp.ne.s32.totalorder %s95, %s96
      %p105 = scmp.eq.s32.totalorder %s27, 0
      %p106 = por %p104, %p105
      %p107 = scmp.ne.s32.totalorder %s95, %s96
      %p108 = scmp.eq.s32.totalorder %s28, 1
      %p109 = por %p107, %p108
      %p111 = scmp.ne.s32.totalorder %s96, %s110
      %p112 = scmp.eq.s32.totalorder %s28, 0
      %p113 = por %p111, %p112
      %s115 = sadd.s32 %s114, 1
      %p118 = scmp.eq.s32.totalorder %s22, 1
      %p119 = scmp.ne.s32.totalorder %s114, %s116
      %p120 = scmp.eq.s32.totalorder %s22, 0
      %p121 = por %p119, %p120
      %p122 = scmp.ne.s32.totalorder %s114, %s116
      %p123 = scmp.eq.s32.totalorder %s27, 1
      %p124 = por %p122, %p123
      %p125 = scmp.ne.s32.totalorder %s116, %s117
      %p126 = scmp.eq.s32.totalorder %s27, 0
      %p127 = por %p125, %p126
      %p128 = scmp.ne.s32.totalorder %s116, %s117
      %p129 = scmp.eq.s32.totalorder %s28, 1
      %p130 = por %p128, %p129
      %p132 = scmp.ne.s32.totalorder %s117, %s131
      %p133 = scmp.eq.s32.totalorder %s28, 0
      %p134 = por %p132, %p133
      %s135 = ssub.s32 %s22, %s29
      %p136 = scmp.eq.s32.totalorder %s135, 0
      %s138 = sadd.s32 %s137, 1
      %s139 = scalar_select %p136, %s137, %s138
      %p142 = pneg %p136
      %p143 = scmp.eq.s32.totalorder %s22, 1
      %p144 = por %p142, %p143
      %p145 = scmp.ne.s32.totalorder %s137, %s140
      %p146 = scmp.eq.s32.totalorder %s22, 0
      %p147 = por %p145, %p146
      %p148 = scmp.ne.s32.totalorder %s137, %s140
      %p149 = scmp.eq.s32.totalorder %s27, 1
      %p150 = por %p148, %p149
      %p151 = scmp.ne.s32.totalorder %s140, %s141
      %p152 = scmp.eq.s32.totalorder %s27, 0
      %p153 = por %p151, %p152
      %p154 = scmp.ne.s32.totalorder %s140, %s141
      %p155 = scmp.eq.s32.totalorder %s28, 1
      %p156 = por %p154, %p155
      %p158 = scmp.ne.s32.totalorder %s141, %s157
      %p159 = scmp.eq.s32.totalorder %s28, 0
      %p160 = por %p158, %p159
      %s161 = ssub.s32 %s22, %s29
      %p162 = scmp.eq.s32.totalorder %s161, 0
      %s164 = sadd.s32 %s163, 1
      %s165 = scalar_select %p162, %s163, %s164
      %p168 = pneg %p162
      %p169 = scmp.eq.s32.totalorder %s22, 1
      %p170 = por %p168, %p169
      %p171 = scmp.ne.s32.totalorder %s163, %s166
      %p172 = scmp.eq.s32.totalorder %s22, 0
      %p173 = por %p171, %p172
      %p174 = scmp.ne.s32.totalorder %s163, %s166
      %p175 = scmp.eq.s32.totalorder %s27, 1
      %p176 = por %p174, %p175
      %p177 = scmp.ne.s32.totalorder %s166, %s167
      %p178 = scmp.eq.s32.totalorder %s27, 0
      %p179 = por %p177, %p178
      %p180 = scmp.ne.s32.totalorder %s166, %s167
      %p181 = scmp.eq.s32.totalorder %s28, 1
      %p182 = por %p180, %p181
      %p184 = scmp.ne.s32.totalorder %s167, %s183
      %p185 = scmp.eq.s32.totalorder %s28, 0
      %p186 = por %p184, %p185
      %s187 = ssub.s32 %s22, %s29
      %p188 = scmp.eq.s32.totalorder %s187, 0
      %s190 = sadd.s32 %s189, 1
      %s191 = scalar_select %p188, %s189, %s190
      %p194 = pneg %p188
      %p195 = scmp.eq.s32.totalorder %s22, 1
      %p196 = por %p194, %p195
      %p197 = scmp.ne.s32.totalorder %s189, %s192
      %p198 = scmp.eq.s32.totalorder %s22, 0
      %p199 = por %p197, %p198
      %p200 = scmp.ne.s32.totalorder %s189, %s192
      %p201 = scmp.eq.s32.totalorder %s27, 1
      %p202 = por %p200, %p201
      %p203 = scmp.ne.s32.totalorder %s192, %s193
      %p204 = scmp.eq.s32.totalorder %s27, 0
      %p205 = por %p203, %p204
      %p206 = scmp.ne.s32.totalorder %s192, %s193
      %p207 = scmp.eq.s32.totalorder %s28, 1
      %p208 = por %p206, %p207
      %p210 = scmp.ne.s32.totalorder %s193, %s209
      %p211 = scmp.eq.s32.totalorder %s28, 0
      %p212 = por %p210, %p211
      %s213 = ssub.s32 %s22, %s29
      %p214 = scmp.eq.s32.totalorder %s213, 0
      %s216 = sadd.s32 %s215, 1
      %s217 = scalar_select %p214, %s215, %s216
      %p220 = pneg %p214
      %p221 = scmp.eq.s32.totalorder %s22, 1
      %p222 = por %p220, %p221
      %p223 = scmp.ne.s32.totalorder %s215, %s218
      %p224 = scmp.eq.s32.totalorder %s22, 0
      %p225 = por %p223, %p224
      %p226 = scmp.ne.s32.totalorder %s215, %s218
      %p227 = scmp.eq.s32.totalorder %s27, 1
      %p228 = por %p226, %p227
      %p229 = scmp.ne.s32.totalorder %s218, %s219
      %p230 = scmp.eq.s32.totalorder %s27, 0
      %p231 = por %p229, %p230
      %p232 = scmp.ne.s32.totalorder %s218, %s219
      %p233 = scmp.eq.s32.totalorder %s28, 1
      %p234 = por %p232, %p233
      %p236 = scmp.ne.s32.totalorder %s219, %s235
      %p237 = scmp.eq.s32.totalorder %s28, 0
      %p238 = por %p236, %p237
      %s239 = ssub.s32 %s22, %s29
      %p240 = scmp.eq.s32.totalorder %s239, 0
      %s242 = sadd.s32 %s241, 1
      %s243 = scalar_select %p240, %s241, %s242
      %p246 = pneg %p240
      %p247 = scmp.eq.s32.totalorder %s22, 1
      %p248 = por %p246, %p247
      %p249 = scmp.ne.s32.totalorder %s241, %s244
      %p250 = scmp.eq.s32.totalorder %s22, 0
      %p251 = por %p249, %p250
      %p252 = scmp.ne.s32.totalorder %s241, %s244
      %p253 = scmp.eq.s32.totalorder %s27, 1
      %p254 = por %p252, %p253
      %p255 = scmp.ne.s32.totalorder %s244, %s245
      %p256 = scmp.eq.s32.totalorder %s27, 0
      %p257 = por %p255, %p256
      %p258 = scmp.ne.s32.totalorder %s244, %s245
      %p259 = scmp.eq.s32.totalorder %s28, 1
      %p260 = por %p258, %p259
      %p262 = scmp.ne.s32.totalorder %s245, %s261
      %p263 = scmp.eq.s32.totalorder %s28, 0
      %p264 = por %p262, %p263
      %p265 = scmp.le.s32.totalorder 1, %s22
      %p266 = scmp.lt.s32.totalorder %s22, 3
      %p267 = pnand %p265, %p266
      %p268 = pneg %p267
      // Predicated region
      $region9: #{tpu_custom_call.1} parent=5 // pred_check
        _
      $region10: #{tpu_custom_call.1} parent=5 // pred_check_branch
        %270 = sbr.rel (%p267) target = $region12
      $region11: #{tpu_custom_call.1} parent=5 // pred_region
        %s271 = ssub.s32 %s22, 1
        // Predicated region
        $region13: #{tpu_custom_call.1} parent=11 // pred_check
          %p272 = pneg %p43
        $region14: #{tpu_custom_call.1} parent=11 // pred_check_branch
          %274 = sbr.rel (%p272) target = $region16
        $region15: #{tpu_custom_call.1} parent=11 // pred_region
          %s276 = ssub.s32 16, 16
          %277 = vsyncadd [#allocation5], %s276
          %s279 = sshll.u32 %s0, 4
          %s280 = int_to_ptr.vmem [resolvable:$true] %s279
          %282 = dma.vmem_to_smem %s280, 16, [#allocation2], [#allocation5]
        $region16: #{tpu_custom_call.1} parent=11 // pred_fallthru
          _
        // Predicated region
        $region17: #{tpu_custom_call.1} parent=11 // pred_check
          %p283 = pneg %p64
        $region18: #{tpu_custom_call.1} parent=11 // pred_check_branch
          %285 = sbr.rel (%p283) target = $region20
        $region19: #{tpu_custom_call.1} parent=11 // pred_region
          _
        $region20: #{tpu_custom_call.1} parent=11 // pred_fallthru
          _
        // Predicated region
        $region21: #{tpu_custom_call.1} parent=11 // pred_check
          %p286 = pneg %p85
        $region22: #{tpu_custom_call.1} parent=11 // pred_check_branch
          %288 = sbr.rel (%p286) target = $region24
        $region23: #{tpu_custom_call.1} parent=11 // pred_region
          _
        $region24: #{tpu_custom_call.1} parent=11 // pred_fallthru
          _
        // Predicated region
        $region25: #{tpu_custom_call.1} parent=11 // pred_check
          %p289 = pneg %p106
        $region26: #{tpu_custom_call.1} parent=11 // pred_check_branch
          %291 = sbr.rel (%p289) target = $region28
        $region27: #{tpu_custom_call.1} parent=11 // pred_region
          _
        $region28: #{tpu_custom_call.1} parent=11 // pred_fallthru
          _
        // Predicated region
        $region29: #{tpu_custom_call.1} parent=11 // pred_check
          %p292 = pneg %p127
        $region30: #{tpu_custom_call.1} parent=11 // pred_check_branch
          %294 = sbr.rel (%p292) target = $region32
        $region31: #{tpu_custom_call.1} parent=11 // pred_region
          _
        $region32: #{tpu_custom_call.1} parent=11 // pred_fallthru
          _
      $region12: #{tpu_custom_call.1} parent=5 // pred_fallthru
        _
      %p295 = scmp.lt.s32.totalorder %s22, 2
      // Predicated region
      $region33: #{tpu_custom_call.1} parent=5 // pred_check
        %p296 = pneg %p295
      $region34: #{tpu_custom_call.1} parent=5 // pred_check_branch
        %298 = sbr.rel (%p296) target = $region36
      $region35: #{tpu_custom_call.1} parent=5 // pred_region
        // Predicated region
        $region37: #{tpu_custom_call.1} parent=35 // pred_check
          %p299 = pneg %p147
        $region38: #{tpu_custom_call.1} parent=35 // pred_check_branch
          %301 = sbr.rel (%p299) target = $region40
        $region39: #{tpu_custom_call.1} parent=35 // pred_region
          %s302 = sand.u32 %s137, 1
          %s303 = scalar_lea.sflag [#allocation3], %s302
          %s304 = sand.u32 %s137, 1
          %s305 = smul.addr %s304, 40
          %s306 = scalar_lea.vmem [#allocation6], %s305
          %s308 = ssub.s32 640, 640
          %309 = vsyncadd %s303, %s308
          %s310 = smul.addr %s22, 128
          %s311 = scalar_lea.hbm %s5, %s310
          %s312 = sshll.u32 %s306, 4
          %s313 = int_to_ptr.vmem [resolvable:$true] %s312
          %318 = dma.hbm_to_vmem [thread:$0]  %s311, 640, %s313, %s303, 256, 128, 8
        $region40: #{tpu_custom_call.1} parent=35 // pred_fallthru
          _
        // Predicated region
        $region41: #{tpu_custom_call.1} parent=35 // pred_check
          %p319 = pneg %p173
        $region42: #{tpu_custom_call.1} parent=35 // pred_check_branch
          %321 = sbr.rel (%p319) target = $region44
        $region43: #{tpu_custom_call.1} parent=35 // pred_region
          %p322 = scmp.lt.s32.totalorder %s22, 1
          %s323 = scalar_select %p322, %s22, 1
          %s324 = smul.addr %s323, 4
          %s325 = scalar_lea.vmem %s6, %s324
        $region44: #{tpu_custom_call.1} parent=35 // pred_fallthru
          _
        // Predicated region
        $region45: #{tpu_custom_call.1} parent=35 // pred_check
          %p326 = pneg %p199
        $region46: #{tpu_custom_call.1} parent=35 // pred_check_branch
          %328 = sbr.rel (%p326) target = $region48
        $region47: #{tpu_custom_call.1} parent=35 // pred_region
          %p329 = scmp.lt.s32.totalorder %s22, 1
          %s330 = scalar_select %p329, %s22, 1
          %s331 = smul.addr %s330, 4
          %s332 = scalar_lea.vmem %s7, %s331
        $region48: #{tpu_custom_call.1} parent=35 // pred_fallthru
          _
        // Predicated region
        $region49: #{tpu_custom_call.1} parent=35 // pred_check
          %p333 = pneg %p225
        $region50: #{tpu_custom_call.1} parent=35 // pred_check_branch
          %335 = sbr.rel (%p333) target = $region52
        $region51: #{tpu_custom_call.1} parent=35 // pred_region
          %p336 = scmp.lt.s32.totalorder %s22, 1
          %s337 = scalar_select %p336, %s22, 1
          %s338 = scalar_lea.vmem %s8, %s337
        $region52: #{tpu_custom_call.1} parent=35 // pred_fallthru
          _
      $region36: #{tpu_custom_call.1} parent=5 // pred_fallthru
        _
      %p339 = scmp.le.s32.totalorder 1, %s22
      %p340 = scmp.lt.s32.totalorder %s22, 3
      %p341 = pnand %p339, %p340
      %p342 = pneg %p341
      // Predicated region
      $region53: #{tpu_custom_call.1} parent=5 // pred_check
        _
      $region54: #{tpu_custom_call.1} parent=5 // pred_check_branch
        %344 = sbr.rel (%p341) target = $region56
      $region55: #{tpu_custom_call.1} parent=5 // pred_region
        %s345 = ssub.s32 %s22, 1
        // Predicated region
        $region57: #{tpu_custom_call.1} parent=55 // pred_check
          %p346 = pneg %p43
        $region58: #{tpu_custom_call.1} parent=55 // pred_check_branch
          %348 = sbr.rel (%p346) target = $region60
        $region59: #{tpu_custom_call.1} parent=55 // pred_region
          %349 = dma.done [#allocation5], 16
        $region60: #{tpu_custom_call.1} parent=55 // pred_fallthru
          _
        %s350 = sand.u32 %s140, 1
        %s351 = scalar_lea.sflag [#allocation3], %s350
        %s352 = sand.u32 %s140, 1
        %s353 = smul.addr %s352, 40
        %s354 = scalar_lea.vmem [#allocation6], %s353
        // Predicated region
        $region61: #{tpu_custom_call.1} parent=55 // pred_check
          %p355 = pneg %p153
        $region62: #{tpu_custom_call.1} parent=55 // pred_check_branch
          %357 = sbr.rel (%p355) target = $region64
        $region63: #{tpu_custom_call.1} parent=55 // pred_region
          %358 = dma.done %s351, 640
        $region64: #{tpu_custom_call.1} parent=55 // pred_fallthru
          _
        %359 = sfence
        %p360 = pneg %p43
        %p361 = pneg %p40
        %p362 = pneg %p64
        %p363 = pneg %p61
        %p364 = pneg %p85
        %p365 = pneg %p82
        %p366 = pneg %p106
        %p367 = pneg %p103
        %p368 = pneg %p127
        %p369 = pneg %p124
        %s370 = sand.u32 %s140, 1
        %s371 = scalar_lea.sflag [#allocation3], %s370
        %s372 = sand.u32 %s140, 1
        %s373 = smul.addr %s372, 40
        %s374 = scalar_lea.vmem [#allocation6], %s373
        %p375 = pneg %p153
        %p376 = pneg %p150
        %p377 = scmp.lt.s32.totalorder %s27, 1
        %s378 = scalar_select %p377, %s27, 1
        %s379 = smul.addr %s378, 4
        %s380 = scalar_lea.vmem %s6, %s379
        %p381 = pneg %p179
        %p382 = pneg %p176
        %p383 = scmp.lt.s32.totalorder %s27, 1
        %s384 = scalar_select %p383, %s27, 1
        %s385 = smul.addr %s384, 4
        %s386 = scalar_lea.vmem %s7, %s385
        %p387 = pneg %p205
        %p388 = pneg %p202
        %p389 = scmp.lt.s32.totalorder %s27, 1
        %s390 = scalar_select %p389, %s27, 1
        %s391 = scalar_lea.vmem %s8, %s390
        %p392 = pneg %p231
        %p393 = pneg %p228
        %p394 = pneg %p257
        %p395 = pneg %p254
        %s396 = sand.u32 %s244, 1
        %s397 = scalar_lea.sflag [#allocation4], %s396
        %s398 = sand.u32 %s244, 1
        %s399 = scalar_lea.vmem [#allocation7], %s398
        %p400 = scmp.lt.s32.totalorder %s27, 1
        %s401 = scalar_select %p400, %s27, 1
        %s402 = smul.addr %s401, 4
        %s403 = scalar_lea.vmem %s6, %s402
        %p404 = scmp.lt.s32.totalorder %s27, 1
        %s405 = scalar_select %p404, %s27, 1
        %s406 = smul.addr %s405, 4
        %s407 = scalar_lea.vmem %s7, %s406
        %p408 = scmp.lt.s32.totalorder %s27, 1
        %s409 = scalar_select %p408, %s27, 1
        %s410 = scalar_lea.vmem %s8, %s409
        %s411 = sld [smem:[#allocation2]]
        %v412 = vstv %s411
        %v413 = vrcp.pop %v412
        %s414 = vtos %v413
        %s415 = sld [smem:[#allocation2 + $0x1]]
        %v416 = vld [vmem:[%s1] sm:$0xff]
        %v417 = vld [vmem:[%s1 + $0x8] sm:$0xff]
        %v418 = vld [vmem:[%s1 + $0x10] sm:$0xff]
        %v419 = vld [vmem:[%s1 + $0x18] sm:$0xff]
        %v420 = vld [vmem:[%s403] sm:$0x1]
        %422 = vset.pattern.permute.xlu0 0
        %423 = vperm.xlu0 %422, %v416
        %v424 = vpop.permute.xlu0 %423
        %427 = vset.pattern.permute.xlu0 0
        %428 = vperm.xlu0 %427, %v417
        %v429 = vpop.permute.xlu0 %428
        %432 = vset.pattern.permute.xlu0 0
        %433 = vperm.xlu0 %432, %v418
        %v434 = vpop.permute.xlu0 %433
        %437 = vset.pattern.permute.xlu0 0
        %438 = vperm.xlu0 %437, %v419
        %v439 = vpop.permute.xlu0 %438
        %v441 = vlaneseq
        %v442 = vshrl.u32 %v441, 7
        %v443 = vsub.s32 0, %v442
        %v444 = vrot.slane %v420, %v443
        %v445 = vmul.f32 %v424, %v444
        %v446 = vmul.f32 %v429, %v444
        %v447 = vmul.f32 %v434, %v444
        %v448 = vmul.f32 %v439, %v444
        %v449 = vld [vmem:[%s403 + $0x1] sm:$0x1]
        %450 = vset.pattern.permute.xlu0 1
        %451 = vperm.xlu0 %450, %v416
        %v452 = vpop.permute.xlu0 %451
        %454 = vset.pattern.permute.xlu0 1
        %455 = vperm.xlu0 %454, %v417
        %v456 = vpop.permute.xlu0 %455
        %458 = vset.pattern.permute.xlu0 1
        %459 = vperm.xlu0 %458, %v418
        %v460 = vpop.permute.xlu0 %459
        %462 = vset.pattern.permute.xlu0 1
        %463 = vperm.xlu0 %462, %v419
        %v464 = vpop.permute.xlu0 %463
        %v466 = vlaneseq
        %v467 = vshrl.u32 %v466, 7
        %v468 = vsub.s32 0, %v467
        %v469 = vrot.slane %v449, %v468
        %v470 = vmul.f32 %v452, %v469
        %v471 = vmul.f32 %v456, %v469
        %v472 = vmul.f32 %v460, %v469
        %v473 = vmul.f32 %v464, %v469
        %v474 = vadd.f32 %v445, %v470
        %v475 = vadd.f32 %v446, %v471
        %v476 = vadd.f32 %v447, %v472
        %v477 = vadd.f32 %v448, %v473
        %v478 = vld [vmem:[%s403 + $0x2] sm:$0x1]
        %479 = vset.pattern.permute.xlu0 2
        %480 = vperm.xlu0 %479, %v416
        %v481 = vpop.permute.xlu0 %480
        %483 = vset.pattern.permute.xlu0 2
        %484 = vperm.xlu0 %483, %v417
        %v485 = vpop.permute.xlu0 %484
        %487 = vset.pattern.permute.xlu0 2
        %488 = vperm.xlu0 %487, %v418
        %v489 = vpop.permute.xlu0 %488
        %491 = vset.pattern.permute.xlu0 2
        %492 = vperm.xlu0 %491, %v419
        %v493 = vpop.permute.xlu0 %492
        %v495 = vlaneseq
        %v496 = vshrl.u32 %v495, 7
        %v497 = vsub.s32 0, %v496
        %v498 = vrot.slane %v478, %v497
        %v499 = vmul.f32 %v481, %v498
        %v500 = vmul.f32 %v485, %v498
        %v501 = vmul.f32 %v489, %v498
        %v502 = vmul.f32 %v493, %v498
        %v503 = vadd.f32 %v474, %v499
        %v504 = vadd.f32 %v475, %v500
        %v505 = vadd.f32 %v476, %v501
        %v506 = vadd.f32 %v477, %v502
        %507 = vset.pattern.permute.xlu0 3
        %508 = vperm.xlu0 %507, %v416
        %v509 = vpop.permute.xlu0 %508
        %511 = vset.pattern.permute.xlu0 3
        %512 = vperm.xlu0 %511, %v417
        %v513 = vpop.permute.xlu0 %512
        %515 = vset.pattern.permute.xlu0 3
        %516 = vperm.xlu0 %515, %v418
        %v517 = vpop.permute.xlu0 %516
        %519 = vset.pattern.permute.xlu0 3
        %520 = vperm.xlu0 %519, %v419
        %v521 = vpop.permute.xlu0 %520
        %v523 = vadd.f32 %v503, %v509
        %v524 = vadd.f32 %v504, %v513
        %v525 = vadd.f32 %v505, %v517
        %v526 = vadd.f32 %v506, %v521
        %v527 = vld [vmem:[%s407] sm:$0x1]
        %v528 = vlaneseq
        %v529 = vshrl.u32 %v528, 7
        %v530 = vsub.s32 0, %v529
        %v531 = vrot.slane %v527, %v530
        %v532 = vmul.f32 %v424, %v531
        %v533 = vmul.f32 %v429, %v531
        %v534 = vmul.f32 %v434, %v531
        %v535 = vmul.f32 %v439, %v531
        %v536 = vld [vmem:[%s407 + $0x1] sm:$0x1]
        %v537 = vlaneseq
        %v538 = vshrl.u32 %v537, 7
        %v539 = vsub.s32 0, %v538
        %v540 = vrot.slane %v536, %v539
        %v541 = vmul.f32 %v452, %v540
        %v542 = vmul.f32 %v456, %v540
        %v543 = vmul.f32 %v460, %v540
        %v544 = vmul.f32 %v464, %v540
        %v545 = vadd.f32 %v532, %v541
        %v546 = vadd.f32 %v533, %v542
        %v547 = vadd.f32 %v534, %v543
        %v548 = vadd.f32 %v535, %v544
        %v549 = vld [vmem:[%s407 + $0x2] sm:$0x1]
        %v550 = vlaneseq
        %v551 = vshrl.u32 %v550, 7
        %v552 = vsub.s32 0, %v551
        %v553 = vrot.slane %v549, %v552
        %v554 = vmul.f32 %v481, %v553
        %v555 = vmul.f32 %v485, %v553
        %v556 = vmul.f32 %v489, %v553
        %v557 = vmul.f32 %v493, %v553
        %v558 = vadd.f32 %v545, %v554
        %v559 = vadd.f32 %v546, %v555
        %v560 = vadd.f32 %v547, %v556
        %v561 = vadd.f32 %v548, %v557
        %v562 = vld [vmem:[%s4] sm:$0xff]
        %v563 = vld [vmem:[%s4 + $0x8] sm:$0xff]
        %v564 = vld [vmem:[%s4 + $0x10] sm:$0xff]
        %v565 = vld [vmem:[%s4 + $0x18] sm:$0xff]
        %v566 = vld [vmem:[%s3] sm:$0xff]
        %v567 = vld [vmem:[%s2] sm:$0xff]
        %v568 = vld [vmem:[%s2 + $0x8] sm:$0xff]
        %v569 = vld [vmem:[%s2 + $0x10] sm:$0xff]
        %v570 = vld [vmem:[%s2 + $0x18] sm:$0xff]
        %572 = vset.pattern.permute.xlu0 0
        %573 = vperm.xlu0 %572, %v567
        %v574 = vpop.permute.xlu0 %573
        %577 = vset.pattern.permute.xlu0 0
        %578 = vperm.xlu0 %577, %v568
        %v579 = vpop.permute.xlu0 %578
        %582 = vset.pattern.permute.xlu0 0
        %583 = vperm.xlu0 %582, %v569
        %v584 = vpop.permute.xlu0 %583
        %587 = vset.pattern.permute.xlu0 0
        %588 = vperm.xlu0 %587, %v570
        %v589 = vpop.permute.xlu0 %588
        loop: start=0, step=1, limit=8
        $region65: #{tpu_custom_call.1} parent=55 // loop_pre_header
          _
        $region66: #{tpu_custom_call.1} parent=55 // loop_header
          %s592 = sphi 0, %s596
          %p593 = scmp.ge.s32.totalorder %s592, 8
          %v597 = vphi 0.0, %v1310
        $region67: #{tpu_custom_call.1} parent=55 // loop_header_branch
          %595 = sbr.rel (%p593) target = $region71
        $region68: #{tpu_custom_call.1} parent=55 // loop_body
          %s598 = smul.u32 %s592, 4
          %s599 = scalar_lea.vmem %s354, %s598 [#allocation6]
          %v600 = vld [vmem:[%s599] sm:$0x1]
          %s601 = sadd.s32 %s598, 1
          %s602 = scalar_lea.vmem %s354, %s601 [#allocation6]
          %v603 = vld [vmem:[%s602] sm:$0x1]
          %v604 = vlaneseq
          %v605 = vshrl.u32 %v604, 7
          %v606 = vsub.s32 0, %v605
          %v607 = vrot.slane %v600, %v606
          %v608 = vmul.f32 %v607, %v558
          %v609 = vmul.f32 %v607, %v559
          %v610 = vmul.f32 %v607, %v560
          %v611 = vmul.f32 %v607, %v561
          %v612 = vadd.f32 %v523, %v608
          %v613 = vadd.f32 %v524, %v609
          %v614 = vadd.f32 %v525, %v610
          %v615 = vadd.f32 %v526, %v611
          %v616 = vsub.f32 %v603, %v600
          %s617 = sadd.s32 %s598, 2
          %s618 = scalar_lea.vmem %s354, %s617 [#allocation6]
          %v619 = vld [vmem:[%s618] sm:$0x1]
          %v620 = vlaneseq
          %v621 = vshrl.u32 %v620, 7
          %v622 = vsub.s32 0, %v621
          %v623 = vrot.slane %v603, %v622
          %v624 = vmul.f32 %v623, %v558
          %v625 = vmul.f32 %v623, %v559
          %v626 = vmul.f32 %v623, %v560
          %v627 = vmul.f32 %v623, %v561
          %v628 = vadd.f32 %v523, %v624
          %v629 = vadd.f32 %v524, %v625
          %v630 = vadd.f32 %v525, %v626
          %v631 = vadd.f32 %v526, %v627
          %v632 = vsub.f32 %v619, %v603
          %s633 = sadd.s32 %s598, 3
          %s634 = scalar_lea.vmem %s354, %s633 [#allocation6]
          %v635 = vld [vmem:[%s634] sm:$0x1]
          %v636 = vlaneseq
          %v637 = vshrl.u32 %v636, 7
          %v638 = vsub.s32 0, %v637
          %v639 = vrot.slane %v619, %v638
          %v640 = vmul.f32 %v639, %v558
          %v641 = vmul.f32 %v639, %v559
          %v642 = vmul.f32 %v639, %v560
          %v643 = vmul.f32 %v639, %v561
          %v644 = vadd.f32 %v523, %v640
          %v645 = vadd.f32 %v524, %v641
          %v646 = vadd.f32 %v525, %v642
          %v647 = vadd.f32 %v526, %v643
          %v648 = vsub.f32 %v635, %v619
          %s649 = sadd.s32 %s598, 4
          %s650 = scalar_lea.vmem %s354, %s649 [#allocation6]
          %v651 = vld [vmem:[%s650] sm:$0x1]
          %v652 = vlaneseq
          %v653 = vshrl.u32 %v652, 7
          %v654 = vsub.s32 0, %v653
          %v655 = vrot.slane %v635, %v654
          %v656 = vmul.f32 %v655, %v558
          %v657 = vmul.f32 %v655, %v559
          %v658 = vmul.f32 %v655, %v560
          %v659 = vmul.f32 %v655, %v561
          %v660 = vadd.f32 %v523, %v656
          %v661 = vadd.f32 %v524, %v657
          %v662 = vadd.f32 %v525, %v658
          %v663 = vadd.f32 %v526, %v659
          %v664 = vsub.f32 %v651, %v635
          %vm665 = vcmp.gt.f32.partialorder %v612, 20.0
          %vm666 = vcmp.gt.f32.partialorder %v628, 20.0
          %vm667 = vcmp.gt.f32.partialorder %v644, 20.0
          %vm668 = vcmp.gt.f32.partialorder %v660, 20.0
          %vm669 = vcmp.gt.f32.partialorder %v613, 20.0
          %vm670 = vcmp.gt.f32.partialorder %v629, 20.0
          %vm671 = vcmp.gt.f32.partialorder %v645, 20.0
          %vm672 = vcmp.gt.f32.partialorder %v661, 20.0
          %vm673 = vcmp.gt.f32.partialorder %v614, 20.0
          %vm674 = vcmp.gt.f32.partialorder %v630, 20.0
          %vm675 = vcmp.gt.f32.partialorder %v646, 20.0
          %vm676 = vcmp.gt.f32.partialorder %v662, 20.0
          %vm677 = vcmp.gt.f32.partialorder %v615, 20.0
          %vm678 = vcmp.gt.f32.partialorder %v631, 20.0
          %vm679 = vcmp.gt.f32.partialorder %v647, 20.0
          %vm680 = vcmp.gt.f32.partialorder %v663, 20.0
          %v681 = vmin.f32 %v612, 20.0
          %v682 = vmin.f32 %v628, 20.0
          %v683 = vmin.f32 %v644, 20.0
          %v684 = vmin.f32 %v660, 20.0
          %v685 = vmin.f32 %v613, 20.0
          %v686 = vmin.f32 %v629, 20.0
          %v687 = vmin.f32 %v645, 20.0
          %v688 = vmin.f32 %v661, 20.0
          %v689 = vmin.f32 %v614, 20.0
          %v690 = vmin.f32 %v630, 20.0
          %v691 = vmin.f32 %v646, 20.0
          %v692 = vmin.f32 %v662, 20.0
          %v693 = vmin.f32 %v615, 20.0
          %v694 = vmin.f32 %v631, 20.0
          %v695 = vmin.f32 %v647, 20.0
          %v696 = vmin.f32 %v663, 20.0
          %v697 = vmul.f32 %v681, 1.442695
          %v698 = vpow.pop %v697
          %v699 = vmul.f32 %v682, 1.442695
          %v700 = vpow.pop %v699
          %v701 = vmul.f32 %v683, 1.442695
          %v702 = vpow.pop %v701
          %v703 = vmul.f32 %v684, 1.442695
          %v704 = vpow.pop %v703
          %v705 = vmul.f32 %v685, 1.442695
          %v706 = vpow.pop %v705
          %v707 = vmul.f32 %v686, 1.442695
          %v708 = vpow.pop %v707
          %v709 = vmul.f32 %v687, 1.442695
          %v710 = vpow.pop %v709
          %v711 = vmul.f32 %v688, 1.442695
          %v712 = vpow.pop %v711
          %v713 = vmul.f32 %v689, 1.442695
          %v714 = vpow.pop %v713
          %v715 = vmul.f32 %v690, 1.442695
          %v716 = vpow.pop %v715
          %v717 = vmul.f32 %v691, 1.442695
          %v718 = vpow.pop %v717
          %v719 = vmul.f32 %v692, 1.442695
          %v720 = vpow.pop %v719
          %v721 = vmul.f32 %v693, 1.442695
          %v722 = vpow.pop %v721
          %v723 = vmul.f32 %v694, 1.442695
          %v724 = vpow.pop %v723
          %v725 = vmul.f32 %v695, 1.442695
          %v726 = vpow.pop %v725
          %v727 = vmul.f32 %v696, 1.442695
          %v728 = vpow.pop %v727
          %v729 = vadd.f32 %v698, 1.0
          %v730 = vadd.f32 %v700, 1.0
          %v731 = vadd.f32 %v702, 1.0
          %v732 = vadd.f32 %v704, 1.0
          %v733 = vadd.f32 %v706, 1.0
          %v734 = vadd.f32 %v708, 1.0
          %v735 = vadd.f32 %v710, 1.0
          %v736 = vadd.f32 %v712, 1.0
          %v737 = vadd.f32 %v714, 1.0
          %v738 = vadd.f32 %v716, 1.0
          %v739 = vadd.f32 %v718, 1.0
          %v740 = vadd.f32 %v720, 1.0
          %v741 = vadd.f32 %v722, 1.0
          %v742 = vadd.f32 %v724, 1.0
          %v743 = vadd.f32 %v726, 1.0
          %v744 = vadd.f32 %v728, 1.0
          %v745 = vlog2.pop %v729
          %v746 = vmul.f32 %v745, 0.6931472
          %v747 = vlog2.pop %v730
          %v748 = vmul.f32 %v747, 0.6931472
          %v749 = vlog2.pop %v731
          %v750 = vmul.f32 %v749, 0.6931472
          %v751 = vlog2.pop %v732
          %v752 = vmul.f32 %v751, 0.6931472
          %v753 = vlog2.pop %v733
          %v754 = vmul.f32 %v753, 0.6931472
          %v755 = vlog2.pop %v734
          %v756 = vmul.f32 %v755, 0.6931472
          %v757 = vlog2.pop %v735
          %v758 = vmul.f32 %v757, 0.6931472
          %v759 = vlog2.pop %v736
          %v760 = vmul.f32 %v759, 0.6931472
          %v761 = vlog2.pop %v737
          %v762 = vmul.f32 %v761, 0.6931472
          %v763 = vlog2.pop %v738
          %v764 = vmul.f32 %v763, 0.6931472
          %v765 = vlog2.pop %v739
          %v766 = vmul.f32 %v765, 0.6931472
          %v767 = vlog2.pop %v740
          %v768 = vmul.f32 %v767, 0.6931472
          %v769 = vlog2.pop %v741
          %v770 = vmul.f32 %v769, 0.6931472
          %v771 = vlog2.pop %v742
          %v772 = vmul.f32 %v771, 0.6931472
          %v773 = vlog2.pop %v743
          %v774 = vmul.f32 %v773, 0.6931472
          %v775 = vlog2.pop %v744
          %v776 = vmul.f32 %v775, 0.6931472
          %v777 = vsel %vm665, %v612, %v746
          %v778 = vsel %vm666, %v628, %v748
          %v779 = vsel %vm667, %v644, %v750
          %v780 = vsel %vm668, %v660, %v752
          %v781 = vsel %vm669, %v613, %v754
          %v782 = vsel %vm670, %v629, %v756
          %v783 = vsel %vm671, %v645, %v758
          %v784 = vsel %vm672, %v661, %v760
          %v785 = vsel %vm673, %v614, %v762
          %v786 = vsel %vm674, %v630, %v764
          %v787 = vsel %vm675, %v646, %v766
          %v788 = vsel %vm676, %v662, %v768
          %v789 = vsel %vm677, %v615, %v770
          %v790 = vsel %vm678, %v631, %v772
          %v791 = vsel %vm679, %v647, %v774
          %v792 = vsel %vm680, %v663, %v776
          %vm793 = vcmask 261120
          %v795 = vsel %vm793, %v562, 0
          %v798 = vsel %vm793, %v563, 0
          %v801 = vsel %vm793, %v564, 0
          %v804 = vsel %vm793, %v565, 0
          %806 = vmatprep.subr.mxu0 %v778
          %807 = vmatpush1.msra.mxu0 %v777
          %808 = vmatprep.subr.mxu0 %v782
          %809 = vmatpush1.msra.mxu0 %v781
          %810 = vmatprep.subr.mxu0 %v786
          %811 = vmatpush1.msra.mxu0 %v785
          %812 = vmatprep.subr.mxu0 %v790
          %813 = vmatpush1.msra.mxu0 %v789
          %814 = vmatprep.subr.mxu0 0.0
          %815 = vmatpush1.msra.mxu0 0.0
          %816 = vmatprep.subr.mxu0 0.0
          %817 = vmatpush1.msra.mxu0 0.0
          %818 = vmatprep.subr.mxu0 0.0
          %819 = vmatpush1.msra.mxu0 0.0
          %820 = vmatprep.subr.mxu0 0.0
          %821 = vmatpush1.msra.mxu0 0.0
          %822 = vmatprep.subr.mxu0 0.0
          %823 = vmatpush1.msra.mxu0 0.0
          %824 = vmatprep.subr.mxu0 0.0
          %825 = vmatpush1.msra.mxu0 0.0
          %826 = vmatprep.subr.mxu0 0.0
          %827 = vmatpush1.msra.mxu0 0.0
          %828 = vmatprep.subr.mxu0 0.0
          %829 = vmatpush1.msra.mxu0 0.0
          %830 = vmatprep.subr.mxu0 0.0
          %831 = vmatpush1.msra.mxu0 0.0
          %832 = vmatprep.subr.mxu0 0.0
          %833 = vmatpush1.msra.mxu0 0.0
          %834 = vmatprep.subr.mxu0 0.0
          %835 = vmatpush1.msra.mxu0 0.0
          %836 = vmatprep.subr.mxu0 0.0
          %837 = vmatpush1.msra.mxu0 0.0
          %838 = vmatprep.subr.mxu0 0.0
          %839 = vmatpush1.msra.mxu0 0.0
          %840 = vmatprep.subr.mxu0 0.0
          %841 = vmatpush1.msra.mxu0 0.0
          %842 = vmatprep.subr.mxu0 0.0
          %843 = vmatpush1.msra.mxu0 0.0
          %844 = vmatprep.subr.mxu0 0.0
          %845 = vmatpush1.msra.mxu0 0.0
          %846 = vmatprep.subr.mxu0 0.0
          %847 = vmatpush1.msra.mxu0 0.0
          %848 = vmatprep.subr.mxu0 0.0
          %849 = vmatpush1.msra.mxu0 0.0
          %850 = vmatprep.subr.mxu0 0.0
          %851 = vmatpush1.msra.mxu0 0.0
          %852 = vmatprep.subr.mxu0 0.0
          %853 = vmatpush1.msra.mxu0 0.0
          %854 = vmatprep.subr.mxu0 0.0
          %855 = vmatpush1.msra.mxu0 0.0
          %856 = vmatprep.subr.mxu0 0.0
          %857 = vmatpush1.msra.mxu0 0.0
          %858 = vmatprep.subr.mxu0 0.0
          %859 = vmatpush1.msra.mxu0 0.0
          %860 = vmatprep.subr.mxu0 0.0
          %861 = vmatpush1.msra.mxu0 0.0
          %862 = vmatprep.subr.mxu0 0.0
          %863 = vmatpush1.msra.mxu0 0.0
          %864 = vmatprep.subr.mxu0 0.0
          %865 = vmatpush1.msra.mxu0 0.0
          %866 = vmatprep.subr.mxu0 0.0
          %867 = vmatpush1.msra.mxu0 0.0
          %868 = vmatprep.subr.mxu0 0.0
          %869 = vmatpush1.msra.mxu0 0.0
          %870 = vmatprep.mubr.f32.mxu0 0.0
          %871 = vmatmul.mubr.f32.gmra.mrb[0].mxu0 %v795
          %v872 = vpop.f32.mrb[0].mxu0
          %v873 = vadd.f32 %v574, %v872
          %v874 = vpop.f32.mrb[0].mxu0
          %v875 = vadd.f32 %v574, %v874
          %876 = vmatprep.mubr.f32.mxu0 0.0
          %877 = vmatmul.mubr.f32.gmra.mrb[0].mxu0 %v798
          %v878 = vpop.f32.mrb[0].mxu0
          %v879 = vadd.f32 %v579, %v878
          %v880 = vpop.f32.mrb[0].mxu0
          %v881 = vadd.f32 %v579, %v880
          %882 = vmatprep.mubr.f32.mxu0 0.0
          %883 = vmatmul.mubr.f32.gmra.mrb[0].mxu0 %v801
          %v884 = vpop.f32.mrb[0].mxu0
          %v885 = vadd.f32 %v584, %v884
          %v886 = vpop.f32.mrb[0].mxu0
          %v887 = vadd.f32 %v584, %v886
          %888 = vmatprep.mubr.f32.mxu0 0.0
          %889 = vmatmul.mubr.f32.gmra.mrb[0].mxu0 %v804
          %v890 = vpop.f32.mrb[0].mxu0
          %v891 = vadd.f32 %v589, %v890
          %v892 = vpop.f32.mrb[0].mxu0
          %v893 = vadd.f32 %v589, %v892
          %894 = vdwg.mxu0
          %895 = vmatprep.subr.mxu0 %v780
          %896 = vmatpush1.msra.mxu0 %v779
          %897 = vmatprep.subr.mxu0 %v784
          %898 = vmatpush1.msra.mxu0 %v783
          %899 = vmatprep.subr.mxu0 %v788
          %900 = vmatpush1.msra.mxu0 %v787
          %901 = vmatprep.subr.mxu0 %v792
          %902 = vmatpush1.msra.mxu0 %v791
          %903 = vmatprep.subr.mxu0 0.0
          %904 = vmatpush1.msra.mxu0 0.0
          %905 = vmatprep.subr.mxu0 0.0
          %906 = vmatpush1.msra.mxu0 0.0
          %907 = vmatprep.subr.mxu0 0.0
          %908 = vmatpush1.msra.mxu0 0.0
          %909 = vmatprep.subr.mxu0 0.0
          %910 = vmatpush1.msra.mxu0 0.0
          %911 = vmatprep.subr.mxu0 0.0
          %912 = vmatpush1.msra.mxu0 0.0
          %913 = vmatprep.subr.mxu0 0.0
          %914 = vmatpush1.msra.mxu0 0.0
          %915 = vmatprep.subr.mxu0 0.0
          %916 = vmatpush1.msra.mxu0 0.0
          %917 = vmatprep.subr.mxu0 0.0
          %918 = vmatpush1.msra.mxu0 0.0
          %919 = vmatprep.subr.mxu0 0.0
          %920 = vmatpush1.msra.mxu0 0.0
          %921 = vmatprep.subr.mxu0 0.0
          %922 = vmatpush1.msra.mxu0 0.0
          %923 = vmatprep.subr.mxu0 0.0
          %924 = vmatpush1.msra.mxu0 0.0
          %925 = vmatprep.subr.mxu0 0.0
          %926 = vmatpush1.msra.mxu0 0.0
          %927 = vmatprep.subr.mxu0 0.0
          %928 = vmatpush1.msra.mxu0 0.0
          %929 = vmatprep.subr.mxu0 0.0
          %930 = vmatpush1.msra.mxu0 0.0
          %931 = vmatprep.subr.mxu0 0.0
          %932 = vmatpush1.msra.mxu0 0.0
          %933 = vmatprep.subr.mxu0 0.0
          %934 = vmatpush1.msra.mxu0 0.0
          %935 = vmatprep.subr.mxu0 0.0
          %936 = vmatpush1.msra.mxu0 0.0
          %937 = vmatprep.subr.mxu0 0.0
          %938 = vmatpush1.msra.mxu0 0.0
          %939 = vmatprep.subr.mxu0 0.0
          %940 = vmatpush1.msra.mxu0 0.0
          %941 = vmatprep.subr.mxu0 0.0
          %942 = vmatpush1.msra.mxu0 0.0
          %943 = vmatprep.subr.mxu0 0.0
          %944 = vmatpush1.msra.mxu0 0.0
          %945 = vmatprep.subr.mxu0 0.0
          %946 = vmatpush1.msra.mxu0 0.0
          %947 = vmatprep.subr.mxu0 0.0
          %948 = vmatpush1.msra.mxu0 0.0
          %949 = vmatprep.subr.mxu0 0.0
          %950 = vmatpush1.msra.mxu0 0.0
          %951 = vmatprep.subr.mxu0 0.0
          %952 = vmatpush1.msra.mxu0 0.0
          %953 = vmatprep.subr.mxu0 0.0
          %954 = vmatpush1.msra.mxu0 0.0
          %955 = vmatprep.subr.mxu0 0.0
          %956 = vmatpush1.msra.mxu0 0.0
          %957 = vmatprep.subr.mxu0 0.0
          %958 = vmatpush1.msra.mxu0 0.0
          %959 = vmatprep.mubr.f32.mxu0 0.0
          %960 = vmatmul.mubr.f32.gmra.mrb[0].mxu0 %v795
          %v961 = vpop.f32.mrb[0].mxu0
          %v962 = vadd.f32 %v574, %v961
          %v963 = vpop.f32.mrb[0].mxu0
          %v964 = vadd.f32 %v574, %v963
          %965 = vmatprep.mubr.f32.mxu0 0.0
          %966 = vmatmul.mubr.f32.gmra.mrb[0].mxu0 %v798
          %v967 = vpop.f32.mrb[0].mxu0
          %v968 = vadd.f32 %v579, %v967
          %v969 = vpop.f32.mrb[0].mxu0
          %v970 = vadd.f32 %v579, %v969
          %971 = vmatprep.mubr.f32.mxu0 0.0
          %972 = vmatmul.mubr.f32.gmra.mrb[0].mxu0 %v801
          %v973 = vpop.f32.mrb[0].mxu0
          %v974 = vadd.f32 %v584, %v973
          %v975 = vpop.f32.mrb[0].mxu0
          %v976 = vadd.f32 %v584, %v975
          %977 = vmatprep.mubr.f32.mxu0 0.0
          %978 = vmatmul.mubr.f32.gmra.mrb[0].mxu0 %v804
          %v979 = vpop.f32.mrb[0].mxu0
          %v980 = vadd.f32 %v589, %v979
          %v981 = vpop.f32.mrb[0].mxu0
          %v982 = vadd.f32 %v589, %v981
          %983 = vdwg.mxu0
          %vm984 = vcmp.gt.f32.partialorder %v873, 20.0
          %vm985 = vcmp.gt.f32.partialorder %v875, 20.0
          %vm986 = vcmp.gt.f32.partialorder %v962, 20.0
          %vm987 = vcmp.gt.f32.partialorder %v964, 20.0
          %vm988 = vcmp.gt.f32.partialorder %v879, 20.0
          %vm989 = vcmp.gt.f32.partialorder %v881, 20.0
          %vm990 = vcmp.gt.f32.partialorder %v968, 20.0
          %vm991 = vcmp.gt.f32.partialorder %v970, 20.0
          %vm992 = vcmp.gt.f32.partialorder %v885, 20.0
          %vm993 = vcmp.gt.f32.partialorder %v887, 20.0
          %vm994 = vcmp.gt.f32.partialorder %v974, 20.0
          %vm995 = vcmp.gt.f32.partialorder %v976, 20.0
          %vm996 = vcmp.gt.f32.partialorder %v891, 20.0
          %vm997 = vcmp.gt.f32.partialorder %v893, 20.0
          %vm998 = vcmp.gt.f32.partialorder %v980, 20.0
          %vm999 = vcmp.gt.f32.partialorder %v982, 20.0
          %v1000 = vmin.f32 %v873, 20.0
          %v1001 = vmin.f32 %v875, 20.0
          %v1002 = vmin.f32 %v962, 20.0
          %v1003 = vmin.f32 %v964, 20.0
          %v1004 = vmin.f32 %v879, 20.0
          %v1005 = vmin.f32 %v881, 20.0
          %v1006 = vmin.f32 %v968, 20.0
          %v1007 = vmin.f32 %v970, 20.0
          %v1008 = vmin.f32 %v885, 20.0
          %v1009 = vmin.f32 %v887, 20.0
          %v1010 = vmin.f32 %v974, 20.0
          %v1011 = vmin.f32 %v976, 20.0
          %v1012 = vmin.f32 %v891, 20.0
          %v1013 = vmin.f32 %v893, 20.0
          %v1014 = vmin.f32 %v980, 20.0
          %v1015 = vmin.f32 %v982, 20.0
          %v1016 = vmul.f32 %v1000, 1.442695
          %v1017 = vpow.pop %v1016
          %v1018 = vmul.f32 %v1001, 1.442695
          %v1019 = vpow.pop %v1018
          %v1020 = vmul.f32 %v1002, 1.442695
          %v1021 = vpow.pop %v1020
          %v1022 = vmul.f32 %v1003, 1.442695
          %v1023 = vpow.pop %v1022
          %v1024 = vmul.f32 %v1004, 1.442695
          %v1025 = vpow.pop %v1024
          %v1026 = vmul.f32 %v1005, 1.442695
          %v1027 = vpow.pop %v1026
          %v1028 = vmul.f32 %v1006, 1.442695
          %v1029 = vpow.pop %v1028
          %v1030 = vmul.f32 %v1007, 1.442695
          %v1031 = vpow.pop %v1030
          %v1032 = vmul.f32 %v1008, 1.442695
          %v1033 = vpow.pop %v1032
          %v1034 = vmul.f32 %v1009, 1.442695
          %v1035 = vpow.pop %v1034
          %v1036 = vmul.f32 %v1010, 1.442695
          %v1037 = vpow.pop %v1036
          %v1038 = vmul.f32 %v1011, 1.442695
          %v1039 = vpow.pop %v1038
          %v1040 = vmul.f32 %v1012, 1.442695
          %v1041 = vpow.pop %v1040
          %v1042 = vmul.f32 %v1013, 1.442695
          %v1043 = vpow.pop %v1042
          %v1044 = vmul.f32 %v1014, 1.442695
          %v1045 = vpow.pop %v1044
          %v1046 = vmul.f32 %v1015, 1.442695
          %v1047 = vpow.pop %v1046
          %v1048 = vadd.f32 %v1017, 1.0
          %v1049 = vadd.f32 %v1019, 1.0
          %v1050 = vadd.f32 %v1021, 1.0
          %v1051 = vadd.f32 %v1023, 1.0
          %v1052 = vadd.f32 %v1025, 1.0
          %v1053 = vadd.f32 %v1027, 1.0
          %v1054 = vadd.f32 %v1029, 1.0
          %v1055 = vadd.f32 %v1031, 1.0
          %v1056 = vadd.f32 %v1033, 1.0
          %v1057 = vadd.f32 %v1035, 1.0
          %v1058 = vadd.f32 %v1037, 1.0
          %v1059 = vadd.f32 %v1039, 1.0
          %v1060 = vadd.f32 %v1041, 1.0
          %v1061 = vadd.f32 %v1043, 1.0
          %v1062 = vadd.f32 %v1045, 1.0
          %v1063 = vadd.f32 %v1047, 1.0
          %v1064 = vlog2.pop %v1048
          %v1065 = vmul.f32 %v1064, 0.6931472
          %v1066 = vlog2.pop %v1049
          %v1067 = vmul.f32 %v1066, 0.6931472
          %v1068 = vlog2.pop %v1050
          %v1069 = vmul.f32 %v1068, 0.6931472
          %v1070 = vlog2.pop %v1051
          %v1071 = vmul.f32 %v1070, 0.6931472
          %v1072 = vlog2.pop %v1052
          %v1073 = vmul.f32 %v1072, 0.6931472
          %v1074 = vlog2.pop %v1053
          %v1075 = vmul.f32 %v1074, 0.6931472
          %v1076 = vlog2.pop %v1054
          %v1077 = vmul.f32 %v1076, 0.6931472
          %v1078 = vlog2.pop %v1055
          %v1079 = vmul.f32 %v1078, 0.6931472
          %v1080 = vlog2.pop %v1056
          %v1081 = vmul.f32 %v1080, 0.6931472
          %v1082 = vlog2.pop %v1057
          %v1083 = vmul.f32 %v1082, 0.6931472
          %v1084 = vlog2.pop %v1058
          %v1085 = vmul.f32 %v1084, 0.6931472
          %v1086 = vlog2.pop %v1059
          %v1087 = vmul.f32 %v1086, 0.6931472
          %v1088 = vlog2.pop %v1060
          %v1089 = vmul.f32 %v1088, 0.6931472
          %v1090 = vlog2.pop %v1061
          %v1091 = vmul.f32 %v1090, 0.6931472
          %v1092 = vlog2.pop %v1062
          %v1093 = vmul.f32 %v1092, 0.6931472
          %v1094 = vlog2.pop %v1063
          %v1095 = vmul.f32 %v1094, 0.6931472
          %v1096 = vsel %vm984, %v873, %v1065
          %v1097 = vsel %vm985, %v875, %v1067
          %v1098 = vsel %vm986, %v962, %v1069
          %v1099 = vsel %vm987, %v964, %v1071
          %v1100 = vsel %vm988, %v879, %v1073
          %v1101 = vsel %vm989, %v881, %v1075
          %v1102 = vsel %vm990, %v968, %v1077
          %v1103 = vsel %vm991, %v970, %v1079
          %v1104 = vsel %vm992, %v885, %v1081
          %v1105 = vsel %vm993, %v887, %v1083
          %v1106 = vsel %vm994, %v974, %v1085
          %v1107 = vsel %vm995, %v976, %v1087
          %v1108 = vsel %vm996, %v891, %v1089
          %v1109 = vsel %vm997, %v893, %v1091
          %v1110 = vsel %vm998, %v980, %v1093
          %v1111 = vsel %vm999, %v982, %v1095
          %v1113 = vsel %vm793, %v566, 0
          %1115 = vmatprep.subr.mxu0 %v1097
          %1116 = vmatpush1.msra.mxu0 %v1096
          %1117 = vmatprep.subr.mxu0 %v1101
          %1118 = vmatpush1.msra.mxu0 %v1100
          %1119 = vmatprep.subr.mxu0 %v1105
          %1120 = vmatpush1.msra.mxu0 %v1104
          %1121 = vmatprep.subr.mxu0 %v1109
          %1122 = vmatpush1.msra.mxu0 %v1108
          %1123 = vmatprep.subr.mxu0 0.0
          %1124 = vmatpush1.msra.mxu0 0.0
          %1125 = vmatprep.subr.mxu0 0.0
          %1126 = vmatpush1.msra.mxu0 0.0
          %1127 = vmatprep.subr.mxu0 0.0
          %1128 = vmatpush1.msra.mxu0 0.0
          %1129 = vmatprep.subr.mxu0 0.0
          %1130 = vmatpush1.msra.mxu0 0.0
          %1131 = vmatprep.subr.mxu0 0.0
          %1132 = vmatpush1.msra.mxu0 0.0
          %1133 = vmatprep.subr.mxu0 0.0
          %1134 = vmatpush1.msra.mxu0 0.0
          %1135 = vmatprep.subr.mxu0 0.0
          %1136 = vmatpush1.msra.mxu0 0.0
          %1137 = vmatprep.subr.mxu0 0.0
          %1138 = vmatpush1.msra.mxu0 0.0
          %1139 = vmatprep.subr.mxu0 0.0
          %1140 = vmatpush1.msra.mxu0 0.0
          %1141 = vmatprep.subr.mxu0 0.0
          %1142 = vmatpush1.msra.mxu0 0.0
          %1143 = vmatprep.subr.mxu0 0.0
          %1144 = vmatpush1.msra.mxu0 0.0
          %1145 = vmatprep.subr.mxu0 0.0
          %1146 = vmatpush1.msra.mxu0 0.0
          %1147 = vmatprep.subr.mxu0 0.0
          %1148 = vmatpush1.msra.mxu0 0.0
          %1149 = vmatprep.subr.mxu0 0.0
          %1150 = vmatpush1.msra.mxu0 0.0
          %1151 = vmatprep.subr.mxu0 0.0
          %1152 = vmatpush1.msra.mxu0 0.0
          %1153 = vmatprep.subr.mxu0 0.0
          %1154 = vmatpush1.msra.mxu0 0.0
          %1155 = vmatprep.subr.mxu0 0.0
          %1156 = vmatpush1.msra.mxu0 0.0
          %1157 = vmatprep.subr.mxu0 0.0
          %1158 = vmatpush1.msra.mxu0 0.0
          %1159 = vmatprep.subr.mxu0 0.0
          %1160 = vmatpush1.msra.mxu0 0.0
          %1161 = vmatprep.subr.mxu0 0.0
          %1162 = vmatpush1.msra.mxu0 0.0
          %1163 = vmatprep.subr.mxu0 0.0
          %1164 = vmatpush1.msra.mxu0 0.0
          %1165 = vmatprep.subr.mxu0 0.0
          %1166 = vmatpush1.msra.mxu0 0.0
          %1167 = vmatprep.subr.mxu0 0.0
          %1168 = vmatpush1.msra.mxu0 0.0
          %1169 = vmatprep.subr.mxu0 0.0
          %1170 = vmatpush1.msra.mxu0 0.0
          %1171 = vmatprep.subr.mxu0 0.0
          %1172 = vmatpush1.msra.mxu0 0.0
          %1173 = vmatprep.subr.mxu0 0.0
          %1174 = vmatpush1.msra.mxu0 0.0
          %1175 = vmatprep.subr.mxu0 0.0
          %1176 = vmatpush1.msra.mxu0 0.0
          %1177 = vmatprep.subr.mxu0 0.0
          %1178 = vmatpush1.msra.mxu0 0.0
          %1179 = vmatprep.mubr.f32.mxu0 0.0
          %1180 = vmatmul.mubr.f32.gmra.mrb[0].mxu0 %v1113
          %v1181 = vpop.f32.mrb[0].mxu0
          %v1182 = vadd.f32 0.0, %v1181
          %v1183 = vpop.f32.mrb[0].mxu0
          %v1184 = vadd.f32 0.0, %v1183
          %1185 = vdwg.mxu0
          %1186 = vmatprep.subr.mxu0 %v1099
          %1187 = vmatpush1.msra.mxu0 %v1098
          %1188 = vmatprep.subr.mxu0 %v1103
          %1189 = vmatpush1.msra.mxu0 %v1102
          %1190 = vmatprep.subr.mxu0 %v1107
          %1191 = vmatpush1.msra.mxu0 %v1106
          %1192 = vmatprep.subr.mxu0 %v1111
          %1193 = vmatpush1.msra.mxu0 %v1110
          %1194 = vmatprep.subr.mxu0 0.0
          %1195 = vmatpush1.msra.mxu0 0.0
          %1196 = vmatprep.subr.mxu0 0.0
          %1197 = vmatpush1.msra.mxu0 0.0
          %1198 = vmatprep.subr.mxu0 0.0
          %1199 = vmatpush1.msra.mxu0 0.0
          %1200 = vmatprep.subr.mxu0 0.0
          %1201 = vmatpush1.msra.mxu0 0.0
          %1202 = vmatprep.subr.mxu0 0.0
          %1203 = vmatpush1.msra.mxu0 0.0
          %1204 = vmatprep.subr.mxu0 0.0
          %1205 = vmatpush1.msra.mxu0 0.0
          %1206 = vmatprep.subr.mxu0 0.0
          %1207 = vmatpush1.msra.mxu0 0.0
          %1208 = vmatprep.subr.mxu0 0.0
          %1209 = vmatpush1.msra.mxu0 0.0
          %1210 = vmatprep.subr.mxu0 0.0
          %1211 = vmatpush1.msra.mxu0 0.0
          %1212 = vmatprep.subr.mxu0 0.0
          %1213 = vmatpush1.msra.mxu0 0.0
          %1214 = vmatprep.subr.mxu0 0.0
          %1215 = vmatpush1.msra.mxu0 0.0
          %1216 = vmatprep.subr.mxu0 0.0
          %1217 = vmatpush1.msra.mxu0 0.0
          %1218 = vmatprep.subr.mxu0 0.0
          %1219 = vmatpush1.msra.mxu0 0.0
          %1220 = vmatprep.subr.mxu0 0.0
          %1221 = vmatpush1.msra.mxu0 0.0
          %1222 = vmatprep.subr.mxu0 0.0
          %1223 = vmatpush1.msra.mxu0 0.0
          %1224 = vmatprep.subr.mxu0 0.0
          %1225 = vmatpush1.msra.mxu0 0.0
          %1226 = vmatprep.subr.mxu0 0.0
          %1227 = vmatpush1.msra.mxu0 0.0
          %1228 = vmatprep.subr.mxu0 0.0
          %1229 = vmatpush1.msra.mxu0 0.0
          %1230 = vmatprep.subr.mxu0 0.0
          %1231 = vmatpush1.msra.mxu0 0.0
          %1232 = vmatprep.subr.mxu0 0.0
          %1233 = vmatpush1.msra.mxu0 0.0
          %1234 = vmatprep.subr.mxu0 0.0
          %1235 = vmatpush1.msra.mxu0 0.0
          %1236 = vmatprep.subr.mxu0 0.0
          %1237 = vmatpush1.msra.mxu0 0.0
          %1238 = vmatprep.subr.mxu0 0.0
          %1239 = vmatpush1.msra.mxu0 0.0
          %1240 = vmatprep.subr.mxu0 0.0
          %1241 = vmatpush1.msra.mxu0 0.0
          %1242 = vmatprep.subr.mxu0 0.0
          %1243 = vmatpush1.msra.mxu0 0.0
          %1244 = vmatprep.subr.mxu0 0.0
          %1245 = vmatpush1.msra.mxu0 0.0
          %1246 = vmatprep.subr.mxu0 0.0
          %1247 = vmatpush1.msra.mxu0 0.0
          %1248 = vmatprep.subr.mxu0 0.0
          %1249 = vmatpush1.msra.mxu0 0.0
          %1250 = vmatprep.mubr.f32.mxu0 0.0
          %1251 = vmatmul.mubr.f32.gmra.mrb[0].mxu0 %v1113
          %v1252 = vpop.f32.mrb[0].mxu0
          %v1253 = vadd.f32 0.0, %v1252
          %v1254 = vpop.f32.mrb[0].mxu0
          %v1255 = vadd.f32 0.0, %v1254
          %1256 = vdwg.mxu0
          %v1257 = vstv %s415
          %v1258 = vadd.f32 %v1182, %v1257
          %v1259 = vadd.f32 %v1184, %v1257
          %v1260 = vadd.f32 %v1253, %v1257
          %v1261 = vadd.f32 %v1255, %v1257
          %v1262 = vand.u32 2147483647, %v1258
          %v1263 = vand.u32 2147483647, %v1259
          %v1264 = vand.u32 2147483647, %v1260
          %v1265 = vand.u32 2147483647, %v1261
          %v1266 = vsub.f32 0.0, %v1262
          %v1267 = vsub.f32 0.0, %v1263
          %v1268 = vsub.f32 0.0, %v1264
          %v1269 = vsub.f32 0.0, %v1265
          %v1270 = vstv %s414
          %v1271 = vmul.f32 %v1266, %v1270
          %v1272 = vmul.f32 %v1267, %v1270
          %v1273 = vmul.f32 %v1268, %v1270
          %v1274 = vmul.f32 %v1269, %v1270
          %v1275 = vmul.f32 %v1271, 1.442695
          %v1276 = vpow.pop %v1275
          %v1277 = vmul.f32 %v1272, 1.442695
          %v1278 = vpow.pop %v1277
          %v1279 = vmul.f32 %v1273, 1.442695
          %v1280 = vpow.pop %v1279
          %v1281 = vmul.f32 %v1274, 1.442695
          %v1282 = vpow.pop %v1281
          %vm1283 = vcmp.ge.f32.partialorder %v1258, 0.0
          %vm1284 = vcmp.ge.f32.partialorder %v1259, 0.0
          %vm1285 = vcmp.ge.f32.partialorder %v1260, 0.0
          %vm1286 = vcmp.ge.f32.partialorder %v1261, 0.0
          %v1287 = vmul.f32 %v1276, 0.5
          %v1288 = vmul.f32 %v1278, 0.5
          %v1289 = vmul.f32 %v1280, 0.5
          %v1290 = vmul.f32 %v1282, 0.5
          %v1291 = vsub.f32 1.0, %v1287
          %v1292 = vsub.f32 1.0, %v1288
          %v1293 = vsub.f32 1.0, %v1289
          %v1294 = vsub.f32 1.0, %v1290
          %v1295 = vsel %vm1283, %v1287, %v1291
          %v1296 = vsel %vm1284, %v1288, %v1292
          %v1297 = vsel %vm1285, %v1289, %v1293
          %v1298 = vsel %vm1286, %v1290, %v1294
          %v1299 = vmul.f32 %v1270, %v1295
          %v1300 = vmul.f32 %v1270, %v1296
          %v1301 = vmul.f32 %v1270, %v1297
          %v1302 = vmul.f32 %v1270, %v1298
          %v1303 = vmul.f32 %v1299, %v616
          %v1304 = vmul.f32 %v1300, %v632
          %v1305 = vmul.f32 %v1301, %v648
          %v1306 = vmul.f32 %v1302, %v664
          %v1307 = vadd.f32 %v597, %v1303
          %v1308 = vadd.f32 %v1307, %v1304
          %v1309 = vadd.f32 %v1308, %v1305
          %v1310 = vadd.f32 %v1309, %v1306
        $region69: #{tpu_custom_call.1} parent=55 // loop_footer
          %s596 = sadd.s32 1, %s592
        $region70: #{tpu_custom_call.1} parent=55 // loop_footer_branch
          %591 = sbr.rel target = $region66
        $region71: #{tpu_custom_call.1} parent=55 // loop_exit
          _
        %v1311 = vsub.f32 0.0, %v597
        %v1312 = vmul.f32 %v1311, 1.442695
        %v1313 = vpow.pop %v1312
        %v1314 = vsub.f32 1.0, %v1313
        %v1315 = vld [vmem:[%s410] sm:$0x1]
        %v1316 = vmul.f32 %v1314, %v1315
        %1317 = vst [vmem:[%s399] sm:$0x1] %v1316
        %s1318 = sand.u32 %s244, 1
        %s1319 = scalar_lea.sflag [#allocation4], %s1318
        %s1320 = sand.u32 %s244, 1
        %s1321 = scalar_lea.vmem [#allocation7], %s1320
        // Predicated region
        $region72: #{tpu_custom_call.1} parent=55 // pred_check
          %p1322 = pneg %p254
        $region73: #{tpu_custom_call.1} parent=55 // pred_check_branch
          %1324 = sbr.rel (%p1322) target = $region75
        $region74: #{tpu_custom_call.1} parent=55 // pred_region
          %s1326 = ssub.s32 16, 16
          %1327 = vsyncadd %s1319, %s1326
          %s1328 = smul.addr %s27, 16
          %s1329 = scalar_lea.hbm %s9, %s1328
          %s1331 = sshll.u32 %s1321, 4
          %s1332 = int_to_ptr.vmem [resolvable:$true] %s1331
          %1334 = dma.vmem_to_hbm [thread:$0]  %s1332, 16, %s1329, %s1319
        $region75: #{tpu_custom_call.1} parent=55 // pred_fallthru
          _
      $region56: #{tpu_custom_call.1} parent=5 // pred_fallthru
        _
      %p1335 = scmp.le.s32.totalorder 2, %s22
      // Predicated region
      $region76: #{tpu_custom_call.1} parent=5 // pred_check
        %p1336 = pneg %p1335
      $region77: #{tpu_custom_call.1} parent=5 // pred_check_branch
        %1338 = sbr.rel (%p1336) target = $region79
      $region78: #{tpu_custom_call.1} parent=5 // pred_region
        %s1339 = ssub.s32 %s22, 2
        // Predicated region
        $region80: #{tpu_custom_call.1} parent=78 // pred_check
          %p1340 = pneg %p260
        $region81: #{tpu_custom_call.1} parent=78 // pred_check_branch
          %1342 = sbr.rel (%p1340) target = $region83
        $region82: #{tpu_custom_call.1} parent=78 // pred_region
          %s1343 = sand.u32 %s245, 1
          %s1344 = scalar_lea.sflag [#allocation4], %s1343
          %s1345 = sand.u32 %s245, 1
          %s1346 = scalar_lea.vmem [#allocation7], %s1345
          %1347 = dma.done %s1344, 16
        $region83: #{tpu_custom_call.1} parent=78 // pred_fallthru
          _
      $region79: #{tpu_custom_call.1} parent=5 // pred_fallthru
        _
    $region6: #{tpu_custom_call.1} parent=1 // loop_footer
      %s26 = sadd.s32 1, %s22
    $region7: #{tpu_custom_call.1} parent=1 // loop_footer_branch
      %21 = sbr.rel target = $region3
    $region8: #{tpu_custom_call.1} parent=1 // loop_exit
      _
    %1348 = vsyncpa [#allocation3], 1
    %s1349 = scalar_lea.sflag [#allocation3], 1
    %1350 = vsyncpa %s1349, 1
    %1351 = vsyncpa [#allocation4], 1
    %s1352 = scalar_lea.sflag [#allocation4], 1
    %1353 = vsyncpa %s1352, 1
    %1354 = vsyncpa [#allocation5], 1
    %s1355 = scalar_lea.sflag [#allocation5], 1
    %1356 = vsyncpa %s1355, 1

</llo_original>
